<compile_context>
chip_gen: v6e
topology: v6e:2x2x1
jax: 0.10.0
libtpu: 0.0.40
codegen_flags: <defaults>
</compile_context>

<pallas_src>
import numpy as np
import jax
import jax.numpy as jnp
from jax import lax
from jax.experimental import pallas as pl
from jax.experimental.pallas import tpu as pltpu

LN_EPS = 1e-5                     # GPT-2 layer_norm_epsilon
NEG_MASK = -1e9                   # stands in for torch.finfo(f32).min (avoids -inf overflow)
GELU_C = 0.7978845608028654       # sqrt(2/pi)


def _gelu_new(x):
    # GPT-2's "gelu_new" (tanh) activation.
    return 0.5 * x * (1.0 + jnp.tanh(GELU_C * (x + 0.044715 * x * x * x)))


# ----------------------------------------------------------------------------
# Fused GPT-2 transformer block kernel (per (batch, query-tile) grid step)
# ----------------------------------------------------------------------------
def make_block_kernel(T, TQ, D, H, F, *, add_pos, final_ln):
    hd = D // H

    def _ln(x, g, b):
        mu = jnp.mean(x, axis=-1, keepdims=True)
        var = jnp.mean((x - mu) ** 2, axis=-1, keepdims=True)
        return (x - mu) * lax.rsqrt(var + LN_EPS) * g + b

    def kernel(*refs):
        it = iter(refs)
        h_ref = next(it)                         # (1, T, D) f32 residual stream
        mask_ref = next(it)                      # (1, 1, T) additive key padding mask
        pos_ref = next(it) if add_pos else None  # (T, D) wpe (first block only)
        (ln1_g, ln1_b, w_q, b_q, w_kv, b_kv, w_o, b_o,
         ln2_g, ln2_b, w_fc, b_fc, w_pr, b_pr) = [next(it) for _ in range(14)]
        if final_ln:
            lnf_g = next(it)
            lnf_b = next(it)
        out_ref = next(it)                       # (1, TQ, D) f32

        qi = pl.program_id(1)
        q0 = pl.multiple_of(qi * TQ, TQ)

        g1 = ln1_g[...]
        be1 = ln1_b[...]

        # ---- LN1 over the full sequence (needed for K/V), bf16 for the MXU ----
        x_full = h_ref[0]
        if add_pos:
            x_full = x_full + pos_ref[...]
        xn_b = _ln(x_full, g1, be1).astype(jnp.bfloat16)            # (T, D)

        # K,V projection for all positions (f32 accumulation, bf16 operands)
        kv = jnp.dot(xn_b, w_kv[...],
                     preferred_element_type=jnp.float32) + b_kv[...]   # (T, 2D) f32
        kv_b = kv.astype(jnp.bfloat16)

        # ---- Query tile: residual rows + LN1 recomputed on the tile (cheap) ----
        x_q = h_ref[0, pl.ds(q0, TQ), :]                             # (TQ, D) f32
        if add_pos:
            x_q = x_q + pos_ref[pl.ds(q0, TQ), :]
        xn_q = _ln(x_q, g1, be1).astype(jnp.bfloat16)
        # w_q / b_q are pre-scaled by 1/sqrt(hd) host-side -> no per-head scale.
        q = jnp.dot(xn_q, w_q[...],
                    preferred_element_type=jnp.float32) + b_q[...]   # (TQ, D) f32
        q_b = q.astype(jnp.bfloat16)

        # ---- combined causal + padding mask, built once (not per head) ----
        rows = lax.broadcasted_iota(jnp.int32, (TQ, T), 0) + q0
        cols = lax.broadcasted_iota(jnp.int32, (TQ, T), 1)
        cmask = jnp.where(rows >= cols, 0.0, NEG_MASK) + mask_ref[0]  # (TQ, T) f32

        # ---- causal multi-head attention, accumulated straight into (TQ, D) ----
        wo = w_o[...]
        attn = jnp.zeros((TQ, D), jnp.float32)
        for h in range(H):                                            # unrolled over heads
            qh = q_b[:, h * hd:(h + 1) * hd]                          # (TQ, hd)
            kh = kv_b[:, h * hd:(h + 1) * hd]                         # (T, hd)
            vh = kv_b[:, D + h * hd:D + (h + 1) * hd]                 # (T, hd)
            # "qd,kd->qk" without transposing K (contract last dims of both).
            s = lax.dot_general(qh, kh, (((1,), (1,)), ((), ())),
                                preferred_element_type=jnp.float32) + cmask
            p = jnp.exp(s - jnp.max(s, axis=-1, keepdims=True))       # unnormalized
            l = jnp.sum(p, axis=-1, keepdims=True)                    # (TQ, 1)
            ctx = jnp.dot(p.astype(jnp.bfloat16), vh,
                          preferred_element_type=jnp.float32)         # (TQ, hd)
            ctx = ctx * pl.reciprocal(l, approx=True)                 # normalize on (TQ,hd)
            attn = attn + jnp.dot(ctx.astype(jnp.bfloat16),
                                  wo[h * hd:(h + 1) * hd, :],
                                  preferred_element_type=jnp.float32)
        h1 = x_q + attn + b_o[...]                                    # residual 1

        # ---- LN2 + MLP ----
        yn = _ln(h1, ln2_g[...], ln2_b[...]).astype(jnp.bfloat16)
        ff = _gelu_new(jnp.dot(yn, w_fc[...],
                               preferred_element_type=jnp.float32) + b_fc[...])
        mlp = jnp.dot(ff.astype(jnp.bfloat16), w_pr[...],
                      preferred_element_type=jnp.float32) + b_pr[...]
        out = h1 + mlp                                                # residual 2

        if final_ln:                                                  # fused ln_f epilogue
            out = _ln(out, lnf_g[...], lnf_b[...])
        out_ref[0] = out

    return kernel


def gpt2_block(hidden, mask_add, lp, gparams, *, first, last, tq):
    B, T, D = hidden.shape
    H = gparams["num_heads"]
    F = lp["w_fc"].shape[1]
    TQ = tq if (tq <= T and T % tq == 0) else T
    NQ = T // TQ
    kernel = make_block_kernel(T, TQ, D, H, F, add_pos=first, final_ln=last)

    def const_spec(shape):
        # Weights / constants: same block every grid step -> single-buffer to save VMEM.
        idx = lambda b, qi, n=len(shape): (0,) * n
        if hasattr(pl, "Buffered"):
            return pl.BlockSpec(shape, idx, pipeline_mode=pl.Buffered(1))
        return pl.BlockSpec(shape, idx)

    in_specs = [
        pl.BlockSpec((1, T, D), lambda b, qi: (b, 0, 0)),   # hidden (full seq for K/V)
        pl.BlockSpec((1, 1, T), lambda b, qi: (b, 0, 0)),   # additive padding mask
    ]
    inputs = [hidden, mask_add]
    if first:
        in_specs.append(const_spec((T, D)))                 # wpe fused into block 0
        inputs.append(gparams["wpe"][:T])
    weight_items = [
        (lp["ln1_g"], (1, D)), (lp["ln1_b"], (1, D)),
        (lp["w_q"], (D, D)), (lp["b_q"], (1, D)),           # c_attn Q (+LoRA, pre-scaled)
        (lp["w_kv"], (D, 2 * D)), (lp["b_kv"], (1, 2 * D)), # c_attn K/V (+LoRA)
        (lp["w_o"], (D, D)), (lp["b_o"], (1, D)),           # attn c_proj
        (lp["ln2_g"], (1, D)), (lp["ln2_b"], (1, D)),
        (lp["w_fc"], (D, F)), (lp["b_fc"], (1, F)),         # mlp c_fc
        (lp["w_proj"], (F, D)), (lp["b_proj"], (1, D)),     # mlp c_proj
    ]
    for arr, shp in weight_items:
        in_specs.append(const_spec(shp))
        inputs.append(arr)
    if last:
        in_specs += [const_spec((1, D)), const_spec((1, D))]  # ln_f fused into last block
        inputs += [gparams["lnf_g"], gparams["lnf_b"]]

    return pl.pallas_call(
        kernel,
        grid=(B, NQ),
        in_specs=in_specs,
        out_specs=pl.BlockSpec((1, TQ, D), lambda b, qi: (b, qi, 0)),
        out_shape=jax.ShapeDtypeStruct((B, T, D), jnp.float32),
        compiler_params=pltpu.CompilerParams(
            dimension_semantics=("parallel", "parallel"),
            vmem_limit_bytes=64 * 1024 * 1024),
    )(*inputs)


# ----------------------------------------------------------------------------
# LLMBackbone forward: hidden = embeds (+wpe) -> 3 blocks -> ln_f (fused)
# ----------------------------------------------------------------------------
def llm_backbone_forward(inputs_embeds, attention_mask, params, tq=256):
    B, T, D = inputs_embeds.shape
    n_layers = len(params["layers"])
    # GPT-2 extended attention mask: (1 - mask) * large_negative, added to scores.
    mask_add = ((1.0 - attention_mask.astype(jnp.float32)) * NEG_MASK).reshape(B, 1, T)
    h = inputs_embeds.astype(jnp.float32)
    for li, lp in enumerate(params["layers"]):
        h = gpt2_block(h, mask_add, lp, params,
                       first=(li == 0), last=(li == n_layers - 1), tq=tq)
    return h


# ----------------------------------------------------------------------------
# Deterministic synthetic parameters (GPT-2-shaped; LoRA folded, Q pre-scaled,
# matmul weights stored in bf16; LN / bias / wpe kept in f32 as in the module)
# ----------------------------------------------------------------------------
def init_params(key, n_layers, D, H, F, n_pos, lora_r, lora_alpha):
    hd = D // H
    scaling = lora_alpha / lora_r
    q_scale = 1.0 / float(np.sqrt(hd))
    params = {"num_heads": H, "layers": []}
    key, kp, kg, kb = jax.random.split(key, 4)
    params["wpe"] = jax.random.normal(kp, (n_pos, D), jnp.float32) * 0.02
    params["lnf_g"] = 1.0 + 0.05 * jax.random.normal(kg, (1, D), jnp.float32)
    params["lnf_b"] = 0.05 * jax.random.normal(kb, (1, D), jnp.float32)
    for _ in range(n_layers):
        key, *ks = jax.random.split(key, 15)
        w_attn = jax.random.normal(ks[0], (D, 3 * D), jnp.float32) * 0.02
        lora_A = jax.random.normal(ks[1], (lora_r, D), jnp.float32) * 0.05
        lora_B = jax.random.normal(ks[2], (3 * D, lora_r), jnp.float32) * 0.05
        # TODO(synk): PEFT initializes lora_B to zeros; random here to exercise the path.
        # Eval-mode LoRA (dropout = identity) folds into the frozen Conv1D weight.
        w_eff = w_attn + scaling * (lora_A.T @ lora_B.T)               # (D, 3D)
        b_attn = 0.01 * jax.random.normal(ks[3], (1, 3 * D), jnp.float32)
        lp = {
            "ln1_g": 1.0 + 0.05 * jax.random.normal(ks[4], (1, D), jnp.float32),
            "ln1_b": 0.05 * jax.random.normal(ks[5], (1, D), jnp.float32),
            # Q columns pre-scaled by 1/sqrt(hd) so the kernel skips the per-head scale.
            "w_q": (w_eff[:, :D] * q_scale).astype(jnp.bfloat16),
            "b_q": b_attn[:, :D] * q_scale,
            "w_kv": w_eff[:, D:].astype(jnp.bfloat16),
            "b_kv": b_attn[:, D:],
            "w_o": (jax.random.normal(ks[6], (D, D), jnp.float32) * 0.02).astype(jnp.bfloat16),
            "b_o": 0.01 * jax.random.normal(ks[7], (1, D), jnp.float32),
            "ln2_g": 1.0 + 0.05 * jax.random.normal(ks[8], (1, D), jnp.float32),
            "ln2_b": 0.05 * jax.random.normal(ks[9], (1, D), jnp.float32),
            "w_fc": (jax.random.normal(ks[10], (D, F), jnp.float32) * 0.02).astype(jnp.bfloat16),
            "b_fc": 0.01 * jax.random.normal(ks[11], (1, F), jnp.float32),
            "w_proj": (jax.random.normal(ks[12], (F, D), jnp.float32) * 0.02).astype(jnp.bfloat16),
            "b_proj": 0.01 * jax.random.normal(ks[13], (1, D), jnp.float32),
        }
        params["layers"].append(lp)
    return params


# ----------------------------------------------------------------------------
# Pure-JAX f32 reference (same math, same bf16-stored weights upcast) for validation
# ----------------------------------------------------------------------------
def reference_forward(inputs_embeds, attention_mask, params):
    B, T, D = inputs_embeds.shape
    H = params["num_heads"]
    hd = D // H
    f32 = lambda a: a.astype(jnp.float32)

    def ln(x, g, b):
        mu = jnp.mean(x, -1, keepdims=True)
        var = jnp.mean((x - mu) ** 2, -1, keepdims=True)
        return (x - mu) / jnp.sqrt(var + LN_EPS) * g + b

    mask_add = (1.0 - attention_mask.astype(jnp.float32)) * NEG_MASK     # (B, T)
    causal = jnp.asarray(np.tril(np.ones((T, T), np.bool_)))
    h = inputs_embeds + params["wpe"][:T][None]
    for lp in params["layers"]:
        xn = ln(h, lp["ln1_g"], lp["ln1_b"])
        q = xn @ f32(lp["w_q"]) + lp["b_q"]          # already scaled by 1/sqrt(hd)
        kv = xn @ f32(lp["w_kv"]) + lp["b_kv"]
        k, v = kv[..., :D], kv[..., D:]
        qh = q.reshape(B, T, H, hd).transpose(0, 2, 1, 3)
        kh = k.reshape(B, T, H, hd).transpose(0, 2, 1, 3)
        vh = v.reshape(B, T, H, hd).transpose(0, 2, 1, 3)
        s = jnp.einsum("bhqd,bhkd->bhqk", qh, kh)
        s = jnp.where(causal[None, None], s, NEG_MASK) + mask_add[:, None, None, :]
        p = jax.nn.softmax(s, axis=-1)
        ctx = jnp.einsum("bhqk,bhkd->bhqd", p, vh).transpose(0, 2, 1, 3).reshape(B, T, D)
        h = h + ctx @ f32(lp["w_o"]) + lp["b_o"]
        yn = ln(h, lp["ln2_g"], lp["ln2_b"])
        h = h + _gelu_new(yn @ f32(lp["w_fc"]) + lp["b_fc"]) @ f32(lp["w_proj"]) + lp["b_proj"]
    return ln(h, params["lnf_g"], params["lnf_b"])


if __name__ == "__main__":
    # Small shapes consistent with the module (GPT-2-like, scaled down).
    # T=16 with tq=8 exercises two query tiles per batch element (the T-tile grid axis).
    B, T, D, H = 2, 16, 64, 4
    F = 4 * D
    n_layers = 3                 # LLMBackbone keeps the first 3 GPT-2 blocks
    n_pos = 32
    lora_r, lora_alpha = 16, 32  # matches LoraConfig(r=16, lora_alpha=32)

    key = jax.random.PRNGKey(0)
    key, kx = jax.random.split(key)
    inputs_embeds = jax.random.normal(kx, (B, T, D), jnp.float32) * 0.02
    attention_mask = jnp.array([[1.0] * T,
                                [1.0] * (T - 2) + [0.0, 0.0]], dtype=jnp.float32)
    params = init_params(key, n_layers, D, H, F, n_pos, lora_r, lora_alpha)

    out = llm_backbone_forward(inputs_embeds, attention_mask, params, tq=8)
    out = jax.block_until_ready(out)
    assert out.shape == (B, T, D)

    ref = reference_forward(inputs_embeds, attention_mask, params)
    np.testing.assert_allclose(np.asarray(out), np.asarray(ref), rtol=5e-2, atol=5e-2)
    print("KERNEL_OK")
</pallas_src>

<mosaic_0001>
module attributes {stable_mosaic.version = 11 : i64} {
  func.func @kernel(%arg0: i32, %arg1: i32, %arg2: memref<1x16x64xf32, #tpu.memory_space<vmem>>, %arg3: memref<1x1x16xf32, #tpu.memory_space<vmem>>, %arg4: memref<16x64xf32, #tpu.memory_space<vmem>>, %arg5: memref<1x64xf32, #tpu.memory_space<vmem>>, %arg6: memref<1x64xf32, #tpu.memory_space<vmem>>, %arg7: memref<64x64xbf16, #tpu.memory_space<vmem>>, %arg8: memref<1x64xf32, #tpu.memory_space<vmem>>, %arg9: memref<64x128xbf16, #tpu.memory_space<vmem>>, %arg10: memref<1x128xf32, #tpu.memory_space<vmem>>, %arg11: memref<64x64xbf16, #tpu.memory_space<vmem>>, %arg12: memref<1x64xf32, #tpu.memory_space<vmem>>, %arg13: memref<1x64xf32, #tpu.memory_space<vmem>>, %arg14: memref<1x64xf32, #tpu.memory_space<vmem>>, %arg15: memref<64x256xbf16, #tpu.memory_space<vmem>>, %arg16: memref<1x256xf32, #tpu.memory_space<vmem>>, %arg17: memref<256x64xbf16, #tpu.memory_space<vmem>>, %arg18: memref<1x64xf32, #tpu.memory_space<vmem>>, %arg19: memref<1x8x64xf32, #tpu.memory_space<vmem>>) attributes {dimension_semantics = [#tpu.dimension_semantics<parallel>, #tpu.dimension_semantics<parallel>], iteration_bounds = array<i64: 2, 2>, scalar_prefetch = 0 : i64, scratch_operands = 0 : i64, tpu.core_type = #tpu.core_type<tc>, window_params = [{transform_indices = @transform_0, window_bounds = array<i64: 1, 16, 64>}, {transform_indices = @transform_1, window_bounds = array<i64: 1, 1, 16>}, {pipeline_mode = #tpu.pipeline_mode<synchronous>, transform_indices = @transform_2, window_bounds = array<i64: 16, 64>}, {pipeline_mode = #tpu.pipeline_mode<synchronous>, transform_indices = @transform_3, window_bounds = array<i64: 1, 64>}, {pipeline_mode = #tpu.pipeline_mode<synchronous>, transform_indices = @transform_4, window_bounds = array<i64: 1, 64>}, {pipeline_mode = #tpu.pipeline_mode<synchronous>, transform_indices = @transform_5, window_bounds = array<i64: 64, 64>}, {pipeline_mode = #tpu.pipeline_mode<synchronous>, transform_indices = @transform_6, window_bounds = array<i64: 1, 64>}, {pipeline_mode = #tpu.pipeline_mode<synchronous>, transform_indices = @transform_7, window_bounds = array<i64: 64, 128>}, {pipeline_mode = #tpu.pipeline_mode<synchronous>, transform_indices = @transform_8, window_bounds = array<i64: 1, 128>}, {pipeline_mode = #tpu.pipeline_mode<synchronous>, transform_indices = @transform_9, window_bounds = array<i64: 64, 64>}, {pipeline_mode = #tpu.pipeline_mode<synchronous>, transform_indices = @transform_10, window_bounds = array<i64: 1, 64>}, {pipeline_mode = #tpu.pipeline_mode<synchronous>, transform_indices = @transform_11, window_bounds = array<i64: 1, 64>}, {pipeline_mode = #tpu.pipeline_mode<synchronous>, transform_indices = @transform_12, window_bounds = array<i64: 1, 64>}, {pipeline_mode = #tpu.pipeline_mode<synchronous>, transform_indices = @transform_13, window_bounds = array<i64: 64, 256>}, {pipeline_mode = #tpu.pipeline_mode<synchronous>, transform_indices = @transform_14, window_bounds = array<i64: 1, 256>}, {pipeline_mode = #tpu.pipeline_mode<synchronous>, transform_indices = @transform_15, window_bounds = array<i64: 256, 64>}, {pipeline_mode = #tpu.pipeline_mode<synchronous>, transform_indices = @transform_16, window_bounds = array<i64: 1, 64>}, {transform_indices = @transform_17, window_bounds = array<i64: 1, 8, 64>}]} {
    %c8_i32 = arith.constant 8 : i32
    %0 = arith.muli %arg1, %c8_i32 : i32
    %1 = tpu.assume_multiple %0, 8 : i32
    %c0 = arith.constant 0 : index
    %c0_0 = arith.constant 0 : index
    %2 = vector.load %arg5[%c0, %c0_0] : memref<1x64xf32, #tpu.memory_space<vmem>>, vector<1x64xf32>
    %c0_1 = arith.constant 0 : index
    %c0_2 = arith.constant 0 : index
    %3 = vector.load %arg6[%c0_1, %c0_2] : memref<1x64xf32, #tpu.memory_space<vmem>>, vector<1x64xf32>
    %c0_3 = arith.constant 0 : index
    %c0_4 = arith.constant 0 : index
    %c0_5 = arith.constant 0 : index
    %4 = vector.load %arg2[%c0_3, %c0_4, %c0_5] : memref<1x16x64xf32, #tpu.memory_space<vmem>>, vector<1x16x64xf32>
    %5 = vector.shape_cast %4 : vector<1x16x64xf32> to vector<16x64xf32>
    %c0_6 = arith.constant 0 : index
    %c0_7 = arith.constant 0 : index
    %6 = vector.load %arg4[%c0_6, %c0_7] : memref<16x64xf32, #tpu.memory_space<vmem>>, vector<16x64xf32>
    %7 = arith.addf %5, %6 : vector<16x64xf32>
    %cst = arith.constant dense<0.000000e+00> : vector<16xf32>
    %8 = vector.multi_reduction <add>, %7, %cst [1] : vector<16x64xf32> to vector<16xf32>
    %9 = vector.shape_cast %8 : vector<16xf32> to vector<16x1xf32>
    %cst_8 = arith.constant 6.400000e+01 : f32
    %10 = vector.broadcast %cst_8 : f32 to vector<16x1xf32>
    %11 = arith.divf %9, %10 : vector<16x1xf32>
    %12 = vector.broadcast %11 : vector<16x1xf32> to vector<16x64xf32>
    %13 = arith.subf %7, %12 : vector<16x64xf32>
    %14 = arith.mulf %13, %13 : vector<16x64xf32>
    %cst_9 = arith.constant dense<0.000000e+00> : vector<16xf32>
    %15 = vector.multi_reduction <add>, %14, %cst_9 [1] : vector<16x64xf32> to vector<16xf32>
    %16 = vector.shape_cast %15 : vector<16xf32> to vector<16x1xf32>
    %cst_10 = arith.constant 6.400000e+01 : f32
    %17 = vector.broadcast %cst_10 : f32 to vector<16x1xf32>
    %18 = arith.divf %16, %17 : vector<16x1xf32>
    %19 = vector.broadcast %11 : vector<16x1xf32> to vector<16x64xf32>
    %20 = arith.subf %7, %19 : vector<16x64xf32>
    %cst_11 = arith.constant 9.99999974E-6 : f32
    %21 = vector.broadcast %cst_11 : f32 to vector<16x1xf32>
    %22 = arith.addf %18, %21 : vector<16x1xf32>
    %23 = math.rsqrt %22 : vector<16x1xf32>
    %24 = vector.broadcast %23 : vector<16x1xf32> to vector<16x64xf32>
    %25 = arith.mulf %20, %24 : vector<16x64xf32>
    %26 = vector.broadcast %2 : vector<1x64xf32> to vector<16x64xf32>
    %27 = arith.mulf %25, %26 : vector<16x64xf32>
    %28 = vector.broadcast %3 : vector<1x64xf32> to vector<16x64xf32>
    %29 = arith.addf %27, %28 : vector<16x64xf32>
    %30 = arith.truncf %29 : vector<16x64xf32> to vector<16x64xbf16>
    %c0_12 = arith.constant 0 : index
    %c0_13 = arith.constant 0 : index
    %31 = vector.load %arg9[%c0_12, %c0_13] : memref<64x128xbf16, #tpu.memory_space<vmem>>, vector<64x128xbf16>
    %cst_14 = arith.constant dense<0.000000e+00> : vector<16x128xf32>
    %32 = tpu.matmul %30, %31, %cst_14 {dimension_numbers = #tpu.dot_dimension_numbers<[1], [0], [0], [1], [0, 0, 1, 1], [], []>} : vector<16x64xbf16>, vector<64x128xbf16>, vector<16x128xf32> -> vector<16x128xf32>
    %c0_15 = arith.constant 0 : index
    %c0_16 = arith.constant 0 : index
    %33 = vector.load %arg10[%c0_15, %c0_16] : memref<1x128xf32, #tpu.memory_space<vmem>>, vector<1x128xf32>
    %34 = vector.broadcast %33 : vector<1x128xf32> to vector<16x128xf32>
    %35 = arith.addf %32, %34 : vector<16x128xf32>
    %36 = arith.truncf %35 : vector<16x128xf32> to vector<16x128xbf16>
    %c0_17 = arith.constant 0 : index
    %37 = arith.index_cast %1 : i32 to index
    %c0_18 = arith.constant 0 : index
    %38 = vector.load %arg2[%c0_17, %37, %c0_18] : memref<1x16x64xf32, #tpu.memory_space<vmem>>, vector<1x8x64xf32>
    %39 = vector.shape_cast %38 : vector<1x8x64xf32> to vector<8x64xf32>
    %40 = arith.index_cast %1 : i32 to index
    %c0_19 = arith.constant 0 : index
    %41 = vector.load %arg4[%40, %c0_19] : memref<16x64xf32, #tpu.memory_space<vmem>>, vector<8x64xf32>
    %42 = arith.addf %39, %41 : vector<8x64xf32>
    %cst_20 = arith.constant dense<0.000000e+00> : vector<8xf32>
    %43 = vector.multi_reduction <add>, %42, %cst_20 [1] : vector<8x64xf32> to vector<8xf32>
    %44 = vector.shape_cast %43 : vector<8xf32> to vector<8x1xf32>
    %cst_21 = arith.constant 6.400000e+01 : f32
    %45 = vector.broadcast %cst_21 : f32 to vector<8x1xf32>
    %46 = arith.divf %44, %45 : vector<8x1xf32>
    %47 = vector.broadcast %46 : vector<8x1xf32> to vector<8x64xf32>
    %48 = arith.subf %42, %47 : vector<8x64xf32>
    %49 = arith.mulf %48, %48 : vector<8x64xf32>
    %cst_22 = arith.constant dense<0.000000e+00> : vector<8xf32>
    %50 = vector.multi_reduction <add>, %49, %cst_22 [1] : vector<8x64xf32> to vector<8xf32>
    %51 = vector.shape_cast %50 : vector<8xf32> to vector<8x1xf32>
    %cst_23 = arith.constant 6.400000e+01 : f32
    %52 = vector.broadcast %cst_23 : f32 to vector<8x1xf32>
    %53 = arith.divf %51, %52 : vector<8x1xf32>
    %54 = vector.broadcast %46 : vector<8x1xf32> to vector<8x64xf32>
    %55 = arith.subf %42, %54 : vector<8x64xf32>
    %cst_24 = arith.constant 9.99999974E-6 : f32
    %56 = vector.broadcast %cst_24 : f32 to vector<8x1xf32>
    %57 = arith.addf %53, %56 : vector<8x1xf32>
    %58 = math.rsqrt %57 : vector<8x1xf32>
    %59 = vector.broadcast %58 : vector<8x1xf32> to vector<8x64xf32>
    %60 = arith.mulf %55, %59 : vector<8x64xf32>
    %61 = vector.broadcast %2 : vector<1x64xf32> to vector<8x64xf32>
    %62 = arith.mulf %60, %61 : vector<8x64xf32>
    %63 = vector.broadcast %3 : vector<1x64xf32> to vector<8x64xf32>
    %64 = arith.addf %62, %63 : vector<8x64xf32>
    %65 = arith.truncf %64 : vector<8x64xf32> to vector<8x64xbf16>
    %c0_25 = arith.constant 0 : index
    %c0_26 = arith.constant 0 : index
    %66 = vector.load %arg7[%c0_25, %c0_26] : memref<64x64xbf16, #tpu.memory_space<vmem>>, vector<64x64xbf16>
    %cst_27 = arith.constant dense<0.000000e+00> : vector<8x64xf32>
    %67 = tpu.matmul %65, %66, %cst_27 {dimension_numbers = #tpu.dot_dimension_numbers<[1], [0], [0], [1], [0, 0, 1, 1], [], []>} : vector<8x64xbf16>, vector<64x64xbf16>, vector<8x64xf32> -> vector<8x64xf32>
    %c0_28 = arith.constant 0 : index
    %c0_29 = arith.constant 0 : index
    %68 = vector.load %arg8[%c0_28, %c0_29] : memref<1x64xf32, #tpu.memory_space<vmem>>, vector<1x64xf32>
    %69 = vector.broadcast %68 : vector<1x64xf32> to vector<8x64xf32>
    %70 = arith.addf %67, %69 : vector<8x64xf32>
    %71 = arith.truncf %70 : vector<8x64xf32> to vector<8x64xbf16>
    %72 = tpu.iota {dimensions = array<i32: 0>} : vector<8x16xi32>
    %73 = vector.broadcast %1 : i32 to vector<8x16xi32>
    %74 = arith.addi %72, %73 : vector<8x16xi32>
    %75 = tpu.iota {dimensions = array<i32: 1>} : vector<8x16xi32>
    %76 = arith.cmpi sge, %74, %75 : vector<8x16xi32>
    %cst_30 = arith.constant 0.000000e+00 : f32
    %cst_31 = arith.constant -1.000000e+09 : f32
    %77 = vector.broadcast %cst_30 : f32 to vector<8x16xf32>
    %78 = vector.broadcast %cst_31 : f32 to vector<8x16xf32>
    %79 = arith.select %76, %77, %78 : vector<8x16xi1>, vector<8x16xf32>
    %c0_32 = arith.constant 0 : index
    %c0_33 = arith.constant 0 : index
    %c0_34 = arith.constant 0 : index
    %80 = vector.load %arg3[%c0_32, %c0_33, %c0_34] : memref<1x1x16xf32, #tpu.memory_space<vmem>>, vector<1x1x16xf32>
    %81 = vector.shape_cast %80 : vector<1x1x16xf32> to vector<1x16xf32>
    %82 = vector.broadcast %81 : vector<1x16xf32> to vector<8x16xf32>
    %83 = arith.addf %79, %82 : vector<8x16xf32>
    %c0_35 = arith.constant 0 : index
    %c0_36 = arith.constant 0 : index
    %84 = vector.load %arg11[%c0_35, %c0_36] : memref<64x64xbf16, #tpu.memory_space<vmem>>, vector<64x64xbf16>
    %cst_37 = arith.constant 0.000000e+00 : f32
    %85 = vector.broadcast %cst_37 : f32 to vector<8x64xf32>
    %86 = vector.extract_strided_slice %71 {offsets = [0, 0], sizes = [8, 16], strides = [1, 1]} : vector<8x64xbf16> to vector<8x16xbf16>
    %87 = vector.extract_strided_slice %36 {offsets = [0, 0], sizes = [16, 16], strides = [1, 1]} : vector<16x128xbf16> to vector<16x16xbf16>
    %88 = vector.extract_strided_slice %36 {offsets = [0, 64], sizes = [16, 16], strides = [1, 1]} : vector<16x128xbf16> to vector<16x16xbf16>
    %cst_38 = arith.constant dense<0.000000e+00> : vector<8x16xf32>
    %89 = tpu.matmul %86, %87, %cst_38 {dimension_numbers = #tpu.dot_dimension_numbers<[1], [1], [0], [0], [0, 0, 1, 0], [], []>} : vector<8x16xbf16>, vector<16x16xbf16>, vector<8x16xf32> -> vector<8x16xf32>
    %90 = arith.addf %89, %83 : vector<8x16xf32>
    %cst_39 = arith.constant dense<0xFF800000> : vector<8xf32>
    %91 = vector.multi_reduction <maximumf>, %90, %cst_39 [1] : vector<8x16xf32> to vector<8xf32>
    %92 = vector.shape_cast %91 : vector<8xf32> to vector<8x1xf32>
    %93 = vector.broadcast %92 : vector<8x1xf32> to vector<8x16xf32>
    %94 = arith.subf %90, %93 : vector<8x16xf32>
    %95 = math.exp %94 : vector<8x16xf32>
    %cst_40 = arith.constant dense<0.000000e+00> : vector<8xf32>
    %96 = vector.multi_reduction <add>, %95, %cst_40 [1] : vector<8x16xf32> to vector<8xf32>
    %97 = vector.shape_cast %96 : vector<8xf32> to vector<8x1xf32>
    %98 = arith.truncf %95 : vector<8x16xf32> to vector<8x16xbf16>
    %cst_41 = arith.constant dense<0.000000e+00> : vector<8x16xf32>
    %99 = tpu.matmul %98, %88, %cst_41 {dimension_numbers = #tpu.dot_dimension_numbers<[1], [0], [0], [1], [0, 0, 1, 1], [], []>} : vector<8x16xbf16>, vector<16x16xbf16>, vector<8x16xf32> -> vector<8x16xf32>
    %100 = tpu.reciprocal %97 {approx = true} : vector<8x1xf32> -> vector<8x1xf32>
    %101 = vector.broadcast %100 : vector<8x1xf32> to vector<8x16xf32>
    %102 = arith.mulf %99, %101 : vector<8x16xf32>
    %103 = arith.truncf %102 : vector<8x16xf32> to vector<8x16xbf16>
    %104 = vector.extract_strided_slice %84 {offsets = [0, 0], sizes = [16, 64], strides = [1, 1]} : vector<64x64xbf16> to vector<16x64xbf16>
    %cst_42 = arith.constant dense<0.000000e+00> : vector<8x64xf32>
    %105 = tpu.matmul %103, %104, %cst_42 {dimension_numbers = #tpu.dot_dimension_numbers<[1], [0], [0], [1], [0, 0, 1, 1], [], []>} : vector<8x16xbf16>, vector<16x64xbf16>, vector<8x64xf32> -> vector<8x64xf32>
    %106 = arith.addf %85, %105 : vector<8x64xf32>
    %107 = vector.extract_strided_slice %71 {offsets = [0, 16], sizes = [8, 16], strides = [1, 1]} : vector<8x64xbf16> to vector<8x16xbf16>
    %108 = vector.extract_strided_slice %36 {offsets = [0, 16], sizes = [16, 16], strides = [1, 1]} : vector<16x128xbf16> to vector<16x16xbf16>
    %109 = vector.extract_strided_slice %36 {offsets = [0, 80], sizes = [16, 16], strides = [1, 1]} : vector<16x128xbf16> to vector<16x16xbf16>
    %cst_43 = arith.constant dense<0.000000e+00> : vector<8x16xf32>
    %110 = tpu.matmul %107, %108, %cst_43 {dimension_numbers = #tpu.dot_dimension_numbers<[1], [1], [0], [0], [0, 0, 1, 0], [], []>} : vector<8x16xbf16>, vector<16x16xbf16>, vector<8x16xf32> -> vector<8x16xf32>
    %111 = arith.addf %110, %83 : vector<8x16xf32>
    %cst_44 = arith.constant dense<0xFF800000> : vector<8xf32>
    %112 = vector.multi_reduction <maximumf>, %111, %cst_44 [1] : vector<8x16xf32> to vector<8xf32>
    %113 = vector.shape_cast %112 : vector<8xf32> to vector<8x1xf32>
    %114 = vector.broadcast %113 : vector<8x1xf32> to vector<8x16xf32>
    %115 = arith.subf %111, %114 : vector<8x16xf32>
    %116 = math.exp %115 : vector<8x16xf32>
    %cst_45 = arith.constant dense<0.000000e+00> : vector<8xf32>
    %117 = vector.multi_reduction <add>, %116, %cst_45 [1] : vector<8x16xf32> to vector<8xf32>
    %118 = vector.shape_cast %117 : vector<8xf32> to vector<8x1xf32>
    %119 = arith.truncf %116 : vector<8x16xf32> to vector<8x16xbf16>
    %cst_46 = arith.constant dense<0.000000e+00> : vector<8x16xf32>
    %120 = tpu.matmul %119, %109, %cst_46 {dimension_numbers = #tpu.dot_dimension_numbers<[1], [0], [0], [1], [0, 0, 1, 1], [], []>} : vector<8x16xbf16>, vector<16x16xbf16>, vector<8x16xf32> -> vector<8x16xf32>
    %121 = tpu.reciprocal %118 {approx = true} : vector<8x1xf32> -> vector<8x1xf32>
    %122 = vector.broadcast %121 : vector<8x1xf32> to vector<8x16xf32>
    %123 = arith.mulf %120, %122 : vector<8x16xf32>
    %124 = arith.truncf %123 : vector<8x16xf32> to vector<8x16xbf16>
    %125 = vector.extract_strided_slice %84 {offsets = [16, 0], sizes = [16, 64], strides = [1, 1]} : vector<64x64xbf16> to vector<16x64xbf16>
    %cst_47 = arith.constant dense<0.000000e+00> : vector<8x64xf32>
    %126 = tpu.matmul %124, %125, %cst_47 {dimension_numbers = #tpu.dot_dimension_numbers<[1], [0], [0], [1], [0, 0, 1, 1], [], []>} : vector<8x16xbf16>, vector<16x64xbf16>, vector<8x64xf32> -> vector<8x64xf32>
    %127 = arith.addf %106, %126 : vector<8x64xf32>
    %128 = vector.extract_strided_slice %71 {offsets = [0, 32], sizes = [8, 16], strides = [1, 1]} : vector<8x64xbf16> to vector<8x16xbf16>
    %129 = vector.extract_strided_slice %36 {offsets = [0, 32], sizes = [16, 16], strides = [1, 1]} : vector<16x128xbf16> to vector<16x16xbf16>
    %130 = vector.extract_strided_slice %36 {offsets = [0, 96], sizes = [16, 16], strides = [1, 1]} : vector<16x128xbf16> to vector<16x16xbf16>
    %cst_48 = arith.constant dense<0.000000e+00> : vector<8x16xf32>
    %131 = tpu.matmul %128, %129, %cst_48 {dimension_numbers = #tpu.dot_dimension_numbers<[1], [1], [0], [0], [0, 0, 1, 0], [], []>} : vector<8x16xbf16>, vector<16x16xbf16>, vector<8x16xf32> -> vector<8x16xf32>
    %132 = arith.addf %131, %83 : vector<8x16xf32>
    %cst_49 = arith.constant dense<0xFF800000> : vector<8xf32>
    %133 = vector.multi_reduction <maximumf>, %132, %cst_49 [1] : vector<8x16xf32> to vector<8xf32>
    %134 = vector.shape_cast %133 : vector<8xf32> to vector<8x1xf32>
    %135 = vector.broadcast %134 : vector<8x1xf32> to vector<8x16xf32>
    %136 = arith.subf %132, %135 : vector<8x16xf32>
    %137 = math.exp %136 : vector<8x16xf32>
    %cst_50 = arith.constant dense<0.000000e+00> : vector<8xf32>
    %138 = vector.multi_reduction <add>, %137, %cst_50 [1] : vector<8x16xf32> to vector<8xf32>
    %139 = vector.shape_cast %138 : vector<8xf32> to vector<8x1xf32>
    %140 = arith.truncf %137 : vector<8x16xf32> to vector<8x16xbf16>
    %cst_51 = arith.constant dense<0.000000e+00> : vector<8x16xf32>
    %141 = tpu.matmul %140, %130, %cst_51 {dimension_numbers = #tpu.dot_dimension_numbers<[1], [0], [0], [1], [0, 0, 1, 1], [], []>} : vector<8x16xbf16>, vector<16x16xbf16>, vector<8x16xf32> -> vector<8x16xf32>
    %142 = tpu.reciprocal %139 {approx = true} : vector<8x1xf32> -> vector<8x1xf32>
    %143 = vector.broadcast %142 : vector<8x1xf32> to vector<8x16xf32>
    %144 = arith.mulf %141, %143 : vector<8x16xf32>
    %145 = arith.truncf %144 : vector<8x16xf32> to vector<8x16xbf16>
    %146 = vector.extract_strided_slice %84 {offsets = [32, 0], sizes = [16, 64], strides = [1, 1]} : vector<64x64xbf16> to vector<16x64xbf16>
    %cst_52 = arith.constant dense<0.000000e+00> : vector<8x64xf32>
    %147 = tpu.matmul %145, %146, %cst_52 {dimension_numbers = #tpu.dot_dimension_numbers<[1], [0], [0], [1], [0, 0, 1, 1], [], []>} : vector<8x16xbf16>, vector<16x64xbf16>, vector<8x64xf32> -> vector<8x64xf32>
    %148 = arith.addf %127, %147 : vector<8x64xf32>
    %149 = vector.extract_strided_slice %71 {offsets = [0, 48], sizes = [8, 16], strides = [1, 1]} : vector<8x64xbf16> to vector<8x16xbf16>
    %150 = vector.extract_strided_slice %36 {offsets = [0, 48], sizes = [16, 16], strides = [1, 1]} : vector<16x128xbf16> to vector<16x16xbf16>
    %151 = vector.extract_strided_slice %36 {offsets = [0, 112], sizes = [16, 16], strides = [1, 1]} : vector<16x128xbf16> to vector<16x16xbf16>
    %cst_53 = arith.constant dense<0.000000e+00> : vector<8x16xf32>
    %152 = tpu.matmul %149, %150, %cst_53 {dimension_numbers = #tpu.dot_dimension_numbers<[1], [1], [0], [0], [0, 0, 1, 0], [], []>} : vector<8x16xbf16>, vector<16x16xbf16>, vector<8x16xf32> -> vector<8x16xf32>
    %153 = arith.addf %152, %83 : vector<8x16xf32>
    %cst_54 = arith.constant dense<0xFF800000> : vector<8xf32>
    %154 = vector.multi_reduction <maximumf>, %153, %cst_54 [1] : vector<8x16xf32> to vector<8xf32>
    %155 = vector.shape_cast %154 : vector<8xf32> to vector<8x1xf32>
    %156 = vector.broadcast %155 : vector<8x1xf32> to vector<8x16xf32>
    %157 = arith.subf %153, %156 : vector<8x16xf32>
    %158 = math.exp %157 : vector<8x16xf32>
    %cst_55 = arith.constant dense<0.000000e+00> : vector<8xf32>
    %159 = vector.multi_reduction <add>, %158, %cst_55 [1] : vector<8x16xf32> to vector<8xf32>
    %160 = vector.shape_cast %159 : vector<8xf32> to vector<8x1xf32>
    %161 = arith.truncf %158 : vector<8x16xf32> to vector<8x16xbf16>
    %cst_56 = arith.constant dense<0.000000e+00> : vector<8x16xf32>
    %162 = tpu.matmul %161, %151, %cst_56 {dimension_numbers = #tpu.dot_dimension_numbers<[1], [0], [0], [1], [0, 0, 1, 1], [], []>} : vector<8x16xbf16>, vector<16x16xbf16>, vector<8x16xf32> -> vector<8x16xf32>
    %163 = tpu.reciprocal %160 {approx = true} : vector<8x1xf32> -> vector<8x1xf32>
    %164 = vector.broadcast %163 : vector<8x1xf32> to vector<8x16xf32>
    %165 = arith.mulf %162, %164 : vector<8x16xf32>
    %166 = arith.truncf %165 : vector<8x16xf32> to vector<8x16xbf16>
    %167 = vector.extract_strided_slice %84 {offsets = [48, 0], sizes = [16, 64], strides = [1, 1]} : vector<64x64xbf16> to vector<16x64xbf16>
    %cst_57 = arith.constant dense<0.000000e+00> : vector<8x64xf32>
    %168 = tpu.matmul %166, %167, %cst_57 {dimension_numbers = #tpu.dot_dimension_numbers<[1], [0], [0], [1], [0, 0, 1, 1], [], []>} : vector<8x16xbf16>, vector<16x64xbf16>, vector<8x64xf32> -> vector<8x64xf32>
    %169 = arith.addf %148, %168 : vector<8x64xf32>
    %170 = arith.addf %42, %169 : vector<8x64xf32>
    %c0_58 = arith.constant 0 : index
    %c0_59 = arith.constant 0 : index
    %171 = vector.load %arg12[%c0_58, %c0_59] : memref<1x64xf32, #tpu.memory_space<vmem>>, vector<1x64xf32>
    %172 = vector.broadcast %171 : vector<1x64xf32> to vector<8x64xf32>
    %173 = arith.addf %170, %172 : vector<8x64xf32>
    %c0_60 = arith.constant 0 : index
    %c0_61 = arith.constant 0 : index
    %174 = vector.load %arg13[%c0_60, %c0_61] : memref<1x64xf32, #tpu.memory_space<vmem>>, vector<1x64xf32>
    %c0_62 = arith.constant 0 : index
    %c0_63 = arith.constant 0 : index
    %175 = vector.load %arg14[%c0_62, %c0_63] : memref<1x64xf32, #tpu.memory_space<vmem>>, vector<1x64xf32>
    %cst_64 = arith.constant dense<0.000000e+00> : vector<8xf32>
    %176 = vector.multi_reduction <add>, %173, %cst_64 [1] : vector<8x64xf32> to vector<8xf32>
    %177 = vector.shape_cast %176 : vector<8xf32> to vector<8x1xf32>
    %cst_65 = arith.constant 6.400000e+01 : f32
    %178 = vector.broadcast %cst_65 : f32 to vector<8x1xf32>
    %179 = arith.divf %177, %178 : vector<8x1xf32>
    %180 = vector.broadcast %179 : vector<8x1xf32> to vector<8x64xf32>
    %181 = arith.subf %173, %180 : vector<8x64xf32>
    %182 = arith.mulf %181, %181 : vector<8x64xf32>
    %cst_66 = arith.constant dense<0.000000e+00> : vector<8xf32>
    %183 = vector.multi_reduction <add>, %182, %cst_66 [1] : vector<8x64xf32> to vector<8xf32>
    %184 = vector.shape_cast %183 : vector<8xf32> to vector<8x1xf32>
    %cst_67 = arith.constant 6.400000e+01 : f32
    %185 = vector.broadcast %cst_67 : f32 to vector<8x1xf32>
    %186 = arith.divf %184, %185 : vector<8x1xf32>
    %187 = vector.broadcast %179 : vector<8x1xf32> to vector<8x64xf32>
    %188 = arith.subf %173, %187 : vector<8x64xf32>
    %cst_68 = arith.constant 9.99999974E-6 : f32
    %189 = vector.broadcast %cst_68 : f32 to vector<8x1xf32>
    %190 = arith.addf %186, %189 : vector<8x1xf32>
    %191 = math.rsqrt %190 : vector<8x1xf32>
    %192 = vector.broadcast %191 : vector<8x1xf32> to vector<8x64xf32>
    %193 = arith.mulf %188, %192 : vector<8x64xf32>
    %194 = vector.broadcast %174 : vector<1x64xf32> to vector<8x64xf32>
    %195 = arith.mulf %193, %194 : vector<8x64xf32>
    %196 = vector.broadcast %175 : vector<1x64xf32> to vector<8x64xf32>
    %197 = arith.addf %195, %196 : vector<8x64xf32>
    %198 = arith.truncf %197 : vector<8x64xf32> to vector<8x64xbf16>
    %c0_69 = arith.constant 0 : index
    %c0_70 = arith.constant 0 : index
    %199 = vector.load %arg15[%c0_69, %c0_70] : memref<64x256xbf16, #tpu.memory_space<vmem>>, vector<64x256xbf16>
    %cst_71 = arith.constant dense<0.000000e+00> : vector<8x256xf32>
    %200 = tpu.matmul %198, %199, %cst_71 {dimension_numbers = #tpu.dot_dimension_numbers<[1], [0], [0], [1], [0, 0, 1, 1], [], []>} : vector<8x64xbf16>, vector<64x256xbf16>, vector<8x256xf32> -> vector<8x256xf32>
    %c0_72 = arith.constant 0 : index
    %c0_73 = arith.constant 0 : index
    %201 = vector.load %arg16[%c0_72, %c0_73] : memref<1x256xf32, #tpu.memory_space<vmem>>, vector<1x256xf32>
    %202 = vector.broadcast %201 : vector<1x256xf32> to vector<8x256xf32>
    %203 = arith.addf %200, %202 : vector<8x256xf32>
    %cst_74 = arith.constant 5.000000e-01 : f32
    %204 = vector.broadcast %cst_74 : f32 to vector<8x256xf32>
    %205 = arith.mulf %204, %203 : vector<8x256xf32>
    %cst_75 = arith.constant 4.471500e-02 : f32
    %206 = vector.broadcast %cst_75 : f32 to vector<8x256xf32>
    %207 = arith.mulf %206, %203 : vector<8x256xf32>
    %208 = arith.mulf %207, %203 : vector<8x256xf32>
    %209 = arith.mulf %208, %203 : vector<8x256xf32>
    %210 = arith.addf %203, %209 : vector<8x256xf32>
    %cst_76 = arith.constant 0.797884583 : f32
    %211 = vector.broadcast %cst_76 : f32 to vector<8x256xf32>
    %212 = arith.mulf %211, %210 : vector<8x256xf32>
    %213 = math.tanh %212 : vector<8x256xf32>
    %cst_77 = arith.constant 1.000000e+00 : f32
    %214 = vector.broadcast %cst_77 : f32 to vector<8x256xf32>
    %215 = arith.addf %214, %213 : vector<8x256xf32>
    %216 = arith.mulf %205, %215 : vector<8x256xf32>
    %217 = arith.truncf %216 : vector<8x256xf32> to vector<8x256xbf16>
    %c0_78 = arith.constant 0 : index
    %c0_79 = arith.constant 0 : index
    %218 = vector.load %arg17[%c0_78, %c0_79] : memref<256x64xbf16, #tpu.memory_space<vmem>>, vector<256x64xbf16>
    %cst_80 = arith.constant dense<0.000000e+00> : vector<8x64xf32>
    %219 = tpu.matmul %217, %218, %cst_80 {dimension_numbers = #tpu.dot_dimension_numbers<[1], [0], [0], [1], [0, 0, 1, 1], [], []>} : vector<8x256xbf16>, vector<256x64xbf16>, vector<8x64xf32> -> vector<8x64xf32>
    %c0_81 = arith.constant 0 : index
    %c0_82 = arith.constant 0 : index
    %220 = vector.load %arg18[%c0_81, %c0_82] : memref<1x64xf32, #tpu.memory_space<vmem>>, vector<1x64xf32>
    %221 = vector.broadcast %220 : vector<1x64xf32> to vector<8x64xf32>
    %222 = arith.addf %219, %221 : vector<8x64xf32>
    %223 = arith.addf %173, %222 : vector<8x64xf32>
    %c0_83 = arith.constant 0 : index
    %c0_84 = arith.constant 0 : index
    %c0_85 = arith.constant 0 : index
    %224 = vector.load %arg19[%c0_83, %c0_84, %c0_85] : memref<1x8x64xf32, #tpu.memory_space<vmem>>, vector<1x8x64xf32>
    %225 = vector.shape_cast %224 : vector<1x8x64xf32> to vector<8x64xf32>
    %226 = vector.shape_cast %223 : vector<8x64xf32> to vector<1x8x64xf32>
    tpu.vector_store %arg19[%c0_83, %c0_84, %c0_85], %226 {strides = array<i32>} : memref<1x8x64xf32, #tpu.memory_space<vmem>>, vector<1x8x64xf32>,
    return
  }
  func.func @transform_0(%arg0: i32, %arg1: i32) -> (i32, i32, i32) {
    %c0_i32 = arith.constant 0 : i32
    %c0_i32_0 = arith.constant 0 : i32
    %c0_i32_1 = arith.constant 0 : i32
    return %arg0, %c0_i32, %c0_i32_0 : i32, i32, i32
  }
  func.func @transform_1(%arg0: i32, %arg1: i32) -> (i32, i32, i32) {
    %c0_i32 = arith.constant 0 : i32
    %c0_i32_0 = arith.constant 0 : i32
    %c0_i32_1 = arith.constant 0 : i32
    return %arg0, %c0_i32, %c0_i32_0 : i32, i32, i32
  }
  func.func @transform_2(%arg0: i32, %arg1: i32) -> (i32, i32) {
    %c0_i32 = arith.constant 0 : i32
    %c0_i32_0 = arith.constant 0 : i32
    %c0_i32_1 = arith.constant 0 : i32
    return %c0_i32, %c0_i32_0 : i32, i32
  }
  func.func @transform_3(%arg0: i32, %arg1: i32) -> (i32, i32) {
    %c0_i32 = arith.constant 0 : i32
    %c0_i32_0 = arith.constant 0 : i32
    %c0_i32_1 = arith.constant 0 : i32
    return %c0_i32, %c0_i32_0 : i32, i32
  }
  func.func @transform_4(%arg0: i32, %arg1: i32) -> (i32, i32) {
    %c0_i32 = arith.constant 0 : i32
    %c0_i32_0 = arith.constant 0 : i32
    %c0_i32_1 = arith.constant 0 : i32
    return %c0_i32, %c0_i32_0 : i32, i32
  }
  func.func @transform_5(%arg0: i32, %arg1: i32) -> (i32, i32) {
    %c0_i32 = arith.constant 0 : i32
    %c0_i32_0 = arith.constant 0 : i32
    %c0_i32_1 = arith.constant 0 : i32
    return %c0_i32, %c0_i32_0 : i32, i32
  }
  func.func @transform_6(%arg0: i32, %arg1: i32) -> (i32, i32) {
    %c0_i32 = arith.constant 0 : i32
    %c0_i32_0 = arith.constant 0 : i32
    %c0_i32_1 = arith.constant 0 : i32
    return %c0_i32, %c0_i32_0 : i32, i32
  }
  func.func @transform_7(%arg0: i32, %arg1: i32) -> (i32, i32) {
    %c0_i32 = arith.constant 0 : i32
    %c0_i32_0 = arith.constant 0 : i32
    %c0_i32_1 = arith.constant 0 : i32
    return %c0_i32, %c0_i32_0 : i32, i32
  }
  func.func @transform_8(%arg0: i32, %arg1: i32) -> (i32, i32) {
    %c0_i32 = arith.constant 0 : i32
    %c0_i32_0 = arith.constant 0 : i32
    %c0_i32_1 = arith.constant 0 : i32
    return %c0_i32, %c0_i32_0 : i32, i32
  }
  func.func @transform_9(%arg0: i32, %arg1: i32) -> (i32, i32) {
    %c0_i32 = arith.constant 0 : i32
    %c0_i32_0 = arith.constant 0 : i32
    %c0_i32_1 = arith.constant 0 : i32
    return %c0_i32, %c0_i32_0 : i32, i32
  }
  func.func @transform_10(%arg0: i32, %arg1: i32) -> (i32, i32) {
    %c0_i32 = arith.constant 0 : i32
    %c0_i32_0 = arith.constant 0 : i32
    %c0_i32_1 = arith.constant 0 : i32
    return %c0_i32, %c0_i32_0 : i32, i32
  }
  func.func @transform_11(%arg0: i32, %arg1: i32) -> (i32, i32) {
    %c0_i32 = arith.constant 0 : i32
    %c0_i32_0 = arith.constant 0 : i32
    %c0_i32_1 = arith.constant 0 : i32
    return %c0_i32, %c0_i32_0 : i32, i32
  }
  func.func @transform_12(%arg0: i32, %arg1: i32) -> (i32, i32) {
    %c0_i32 = arith.constant 0 : i32
    %c0_i32_0 = arith.constant 0 : i32
    %c0_i32_1 = arith.constant 0 : i32
    return %c0_i32, %c0_i32_0 : i32, i32
  }
  func.func @transform_13(%arg0: i32, %arg1: i32) -> (i32, i32) {
    %c0_i32 = arith.constant 0 : i32
    %c0_i32_0 = arith.constant 0 : i32
    %c0_i32_1 = arith.constant 0 : i32
    return %c0_i32, %c0_i32_0 : i32, i32
  }
  func.func @transform_14(%arg0: i32, %arg1: i32) -> (i32, i32) {
    %c0_i32 = arith.constant 0 : i32
    %c0_i32_0 = arith.constant 0 : i32
    %c0_i32_1 = arith.constant 0 : i32
    return %c0_i32, %c0_i32_0 : i32, i32
  }
  func.func @transform_15(%arg0: i32, %arg1: i32) -> (i32, i32) {
    %c0_i32 = arith.constant 0 : i32
    %c0_i32_0 = arith.constant 0 : i32
    %c0_i32_1 = arith.constant 0 : i32
    return %c0_i32, %c0_i32_0 : i32, i32
  }
  func.func @transform_16(%arg0: i32, %arg1: i32) -> (i32, i32) {
    %c0_i32 = arith.constant 0 : i32
    %c0_i32_0 = arith.constant 0 : i32
    %c0_i32_1 = arith.constant 0 : i32
    return %c0_i32, %c0_i32_0 : i32, i32
  }
  func.func @transform_17(%arg0: i32, %arg1: i32) -> (i32, i32, i32) {
    %c0_i32 = arith.constant 0 : i32
    %c0_i32_0 = arith.constant 0 : i32
    return %arg0, %arg1, %c0_i32 : i32, i32, i32
  }
}

</mosaic_0001>

<llo_original>
// kernel: tpu_custom_call.1
$region0: #{tpu_custom_call.1}
  #allocation0 [shape = 'u32[]', space=smem, size = 0x4, offset = 0x4, fixed_abs, tag = 'smem constant byte address 0x4 - core index']
  #allocation1 [shape = 'u32[144,128]{1,0:T(1,128)}', space=vmem, size = 0x12000, scoped, tag = 'internal scratch']
  %s0 = inlined_call_operand.vmem [shape: f32[2,16,64], index: 0, kind: input, shape index: {}]
  %s1 = inlined_call_operand.hbm [shape: f32[2,1,16], index: 1, kind: input, shape index: {}]
  %s2 = inlined_call_operand.hbm [shape: f32[16,64], index: 2, kind: input, shape index: {}]
  %s3 = inlined_call_operand.vmem [shape: f32[1,64], index: 3, kind: input, shape index: {}]
  %s4 = inlined_call_operand.vmem [shape: f32[1,64], index: 4, kind: input, shape index: {}]
  %s5 = inlined_call_operand.vmem [shape: bf16[64,64], index: 5, kind: input, shape index: {}]
  %s6 = inlined_call_operand.vmem [shape: f32[1,64], index: 6, kind: input, shape index: {}]
  %s7 = inlined_call_operand.vmem [shape: bf16[64,128], index: 7, kind: input, shape index: {}]
  %s8 = inlined_call_operand.vmem [shape: f32[1,128], index: 8, kind: input, shape index: {}]
  %s9 = inlined_call_operand.vmem [shape: bf16[64,64], index: 9, kind: input, shape index: {}]
  %s10 = inlined_call_operand.vmem [shape: f32[1,64], index: 10, kind: input, shape index: {}]
  %s11 = inlined_call_operand.vmem [shape: f32[1,64], index: 11, kind: input, shape index: {}]
  %s12 = inlined_call_operand.vmem [shape: f32[1,64], index: 12, kind: input, shape index: {}]
  %s13 = inlined_call_operand.vmem [shape: bf16[64,256], index: 13, kind: input, shape index: {}]
  %s14 = inlined_call_operand.vmem [shape: f32[1,256], index: 14, kind: input, shape index: {}]
  %s15 = inlined_call_operand.vmem [shape: bf16[256,64], index: 15, kind: input, shape index: {}]
  %s16 = inlined_call_operand.vmem [shape: f32[1,64], index: 16, kind: input, shape index: {}]
  %s17 = inlined_call_operand.hbm [shape: f32[2,16,64], index: 17, kind: output, shape index: {}]
  %s18 = sld [smem:[#allocation0]]
  $region109: #{tpu_custom_call.1} parent=0
    _
  %s20 = ssub.s32 1, %s18
  %s21 = scalar_select 0, %s20, %s18
  $region1: #{tpu_custom_call.1} parent=0
    #allocation2 [shape = 'u8[1024]{0}', space=vmem, size = 0x400, scoped, tag = 'input window, operand 1']
    #allocation3 [shape = 's32[2]{0}', space=sflag, size = 0x8, scoped, tag = 'scoped memory for tpu_custom_call.1']
    #allocation4 [shape = 's32[2]{0}', space=sflag, size = 0x8, scoped, tag = 'scoped memory for tpu_custom_call.1']
    #allocation5 [shape = 'u8[8192]{0}', space=vmem, size = 0x2000, scoped, tag = 'input window, operand 2, single buffered']
    #allocation6 [shape = 's32[1]{0}', space=sflag, size = 0x4, scoped, tag = 'scoped memory for tpu_custom_call.1']
    #allocation7 [shape = 'u8[8192]{0}', space=vmem, size = 0x2000, scoped, tag = 'output window, operand 0']
    %22 = vsyncpa [#allocation3], 0
    %s23 = scalar_lea.sflag [#allocation3], 1
    %24 = vsyncpa %s23, 0
    %25 = vsyncpa [#allocation6], 0
    %26 = vsyncpa [#allocation4], 0
    %s27 = scalar_lea.sflag [#allocation4], 1
    %28 = vsyncpa %s27, 0
    loop: start=0, step=1, limit=6
    $region2: #{tpu_custom_call.1} parent=1 // loop_pre_header
      _
    $region3: #{tpu_custom_call.1} parent=1 // loop_header
      %s30 = sphi 0, %s34
      %p31 = scmp.ge.s32.totalorder %s30, 6
      %s37 = sphi 0, %s49
      %s38 = sphi 0, %s45
      %s39 = sphi 0, %s37
      %s40 = sphi 0, %s38
      %s41 = sphi 0, %s39
      %s42 = sphi 0, %s40
      %s52 = sphi 0, %s54
      %s55 = sphi 0, %s52
      %s56 = sphi 0, %s55
      %s72 = sphi 0, %s56
      %s78 = sphi 0, %s80
      %s81 = sphi 0, %s78
      %s82 = sphi 0, %s81
      %s98 = sphi 0, %s82
      %s102 = sphi 0, %s102
      %s104 = sphi 0, %s102
      %s105 = sphi 0, %s104
      %s119 = sphi 0, %s105
      %s123 = sphi 0, %s123
      %s125 = sphi 0, %s123
      %s126 = sphi 0, %s125
      %s140 = sphi 0, %s126
      %s144 = sphi 0, %s144
      %s146 = sphi 0, %s144
      %s147 = sphi 0, %s146
      %s161 = sphi 0, %s147
      %s165 = sphi 0, %s165
      %s167 = sphi 0, %s165
      %s168 = sphi 0, %s167
      %s182 = sphi 0, %s168
      %s186 = sphi 0, %s186
      %s188 = sphi 0, %s186
      %s189 = sphi 0, %s188
      %s203 = sphi 0, %s189
      %s207 = sphi 0, %s207
      %s209 = sphi 0, %s207
      %s210 = sphi 0, %s209
      %s224 = sphi 0, %s210
      %s228 = sphi 0, %s228
      %s230 = sphi 0, %s228
      %s231 = sphi 0, %s230
      %s245 = sphi 0, %s231
      %s249 = sphi 0, %s249
      %s251 = sphi 0, %s249
      %s252 = sphi 0, %s251
      %s266 = sphi 0, %s252
      %s270 = sphi 0, %s270
      %s272 = sphi 0, %s270
      %s273 = sphi 0, %s272
      %s287 = sphi 0, %s273
      %s291 = sphi 0, %s291
      %s293 = sphi 0, %s291
      %s294 = sphi 0, %s293
      %s308 = sphi 0, %s294
      %s312 = sphi 0, %s312
      %s314 = sphi 0, %s312
      %s315 = sphi 0, %s314
      %s329 = sphi 0, %s315
      %s333 = sphi 0, %s333
      %s335 = sphi 0, %s333
      %s336 = sphi 0, %s335
      %s350 = sphi 0, %s336
      %s354 = sphi 0, %s354
      %s356 = sphi 0, %s354
      %s357 = sphi 0, %s356
      %s371 = sphi 0, %s357
      %s375 = sphi 0, %s375
      %s377 = sphi 0, %s375
      %s378 = sphi 0, %s377
      %s392 = sphi 0, %s378
      %s396 = sphi 0, %s396
      %s398 = sphi 0, %s396
      %s399 = sphi 0, %s398
      %s413 = sphi 0, %s399
      %s421 = sphi 0, %s423
      %s424 = sphi 0, %s421
      %s425 = sphi 0, %s424
      %s441 = sphi 0, %s425
    $region4: #{tpu_custom_call.1} parent=1 // loop_header_branch
      %33 = sbr.rel (%p31) target = $region8
    $region5: #{tpu_custom_call.1} parent=1 // loop_body
      %s35 = ssub.s32 %s30, 1
      %s36 = ssub.s32 %s30, 2
      %s43 = sadd.s32 1, %s38
      %p44 = scmp.ge.s32.totalorder %s43, 2
      %s45 = scalar_select %p44, 0, %s43
      %s46 = sadd.s32 1, %s37
      %s47 = scalar_select %p44, %s46, %s37
      %p48 = scmp.ge.s32.totalorder %s47, 2
      %s49 = scalar_select %p48, 0, %s47
      %s50 = ssub.s32 %s37, %s49
      %p51 = scmp.eq.s32.totalorder %s50, 0
      %s53 = sadd.s32 %s52, 1
      %s54 = scalar_select %p51, %s52, %s53
      %p57 = pneg %p51
      %p58 = scmp.eq.s32.totalorder %s30, 3
      %p59 = por %p57, %p58
      %p60 = scmp.ne.s32.totalorder %s52, %s55
      %p61 = scmp.eq.s32.totalorder %s30, 0
      %p62 = por %p60, %p61
      %p63 = scmp.ne.s32.totalorder %s52, %s55
      %p64 = scmp.eq.s32.totalorder %s35, 3
      %p65 = por %p63, %p64
      %p66 = scmp.ne.s32.totalorder %s55, %s56
      %p67 = scmp.eq.s32.totalorder %s35, 0
      %p68 = por %p66, %p67
      %p69 = scmp.ne.s32.totalorder %s55, %s56
      %p70 = scmp.eq.s32.totalorder %s36, 3
      %p71 = por %p69, %p70
      %p73 = scmp.ne.s32.totalorder %s56, %s72
      %p74 = scmp.eq.s32.totalorder %s36, 0
      %p75 = por %p73, %p74
      %s76 = ssub.s32 %s37, %s49
      %p77 = scmp.eq.s32.totalorder %s76, 0
      %s79 = sadd.s32 %s78, 1
      %s80 = scalar_select %p77, %s78, %s79
      %p83 = pneg %p77
      %p84 = scmp.eq.s32.totalorder %s30, 3
      %p85 = por %p83, %p84
      %p86 = scmp.ne.s32.totalorder %s78, %s81
      %p87 = scmp.eq.s32.totalorder %s30, 0
      %p88 = por %p86, %p87
      %p89 = scmp.ne.s32.totalorder %s78, %s81
      %p90 = scmp.eq.s32.totalorder %s35, 3
      %p91 = por %p89, %p90
      %p92 = scmp.ne.s32.totalorder %s81, %s82
      %p93 = scmp.eq.s32.totalorder %s35, 0
      %p94 = por %p92, %p93
      %p95 = scmp.ne.s32.totalorder %s81, %s82
      %p96 = scmp.eq.s32.totalorder %s36, 3
      %p97 = por %p95, %p96
      %p99 = scmp.ne.s32.totalorder %s82, %s98
      %p100 = scmp.eq.s32.totalorder %s36, 0
      %p101 = por %p99, %p100
      %s103 = sadd.s32 %s102, 1
      %p106 = scmp.eq.s32.totalorder %s30, 3
      %p107 = scmp.ne.s32.totalorder %s102, %s104
      %p108 = scmp.eq.s32.totalorder %s30, 0
      %p109 = por %p107, %p108
      %p110 = scmp.ne.s32.totalorder %s102, %s104
      %p111 = scmp.eq.s32.totalorder %s35, 3
      %p112 = por %p110, %p111
      %p113 = scmp.ne.s32.totalorder %s104, %s105
      %p114 = scmp.eq.s32.totalorder %s35, 0
      %p115 = por %p113, %p114
      %p116 = scmp.ne.s32.totalorder %s104, %s105
      %p117 = scmp.eq.s32.totalorder %s36, 3
      %p118 = por %p116, %p117
      %p120 = scmp.ne.s32.totalorder %s105, %s119
      %p121 = scmp.eq.s32.totalorder %s36, 0
      %p122 = por %p120, %p121
      %s124 = sadd.s32 %s123, 1
      %p127 = scmp.eq.s32.totalorder %s30, 3
      %p128 = scmp.ne.s32.totalorder %s123, %s125
      %p129 = scmp.eq.s32.totalorder %s30, 0
      %p130 = por %p128, %p129
      %p131 = scmp.ne.s32.totalorder %s123, %s125
      %p132 = scmp.eq.s32.totalorder %s35, 3
      %p133 = por %p131, %p132
      %p134 = scmp.ne.s32.totalorder %s125, %s126
      %p135 = scmp.eq.s32.totalorder %s35, 0
      %p136 = por %p134, %p135
      %p137 = scmp.ne.s32.totalorder %s125, %s126
      %p138 = scmp.eq.s32.totalorder %s36, 3
      %p139 = por %p137, %p138
      %p141 = scmp.ne.s32.totalorder %s126, %s140
      %p142 = scmp.eq.s32.totalorder %s36, 0
      %p143 = por %p141, %p142
      %s145 = sadd.s32 %s144, 1
      %p148 = scmp.eq.s32.totalorder %s30, 3
      %p149 = scmp.ne.s32.totalorder %s144, %s146
      %p150 = scmp.eq.s32.totalorder %s30, 0
      %p151 = por %p149, %p150
      %p152 = scmp.ne.s32.totalorder %s144, %s146
      %p153 = scmp.eq.s32.totalorder %s35, 3
      %p154 = por %p152, %p153
      %p155 = scmp.ne.s32.totalorder %s146, %s147
      %p156 = scmp.eq.s32.totalorder %s35, 0
      %p157 = por %p155, %p156
      %p158 = scmp.ne.s32.totalorder %s146, %s147
      %p159 = scmp.eq.s32.totalorder %s36, 3
      %p160 = por %p158, %p159
      %p162 = scmp.ne.s32.totalorder %s147, %s161
      %p163 = scmp.eq.s32.totalorder %s36, 0
      %p164 = por %p162, %p163
      %s166 = sadd.s32 %s165, 1
      %p169 = scmp.eq.s32.totalorder %s30, 3
      %p170 = scmp.ne.s32.totalorder %s165, %s167
      %p171 = scmp.eq.s32.totalorder %s30, 0
      %p172 = por %p170, %p171
      %p173 = scmp.ne.s32.totalorder %s165, %s167
      %p174 = scmp.eq.s32.totalorder %s35, 3
      %p175 = por %p173, %p174
      %p176 = scmp.ne.s32.totalorder %s167, %s168
      %p177 = scmp.eq.s32.totalorder %s35, 0
      %p178 = por %p176, %p177
      %p179 = scmp.ne.s32.totalorder %s167, %s168
      %p180 = scmp.eq.s32.totalorder %s36, 3
      %p181 = por %p179, %p180
      %p183 = scmp.ne.s32.totalorder %s168, %s182
      %p184 = scmp.eq.s32.totalorder %s36, 0
      %p185 = por %p183, %p184
      %s187 = sadd.s32 %s186, 1
      %p190 = scmp.eq.s32.totalorder %s30, 3
      %p191 = scmp.ne.s32.totalorder %s186, %s188
      %p192 = scmp.eq.s32.totalorder %s30, 0
      %p193 = por %p191, %p192
      %p194 = scmp.ne.s32.totalorder %s186, %s188
      %p195 = scmp.eq.s32.totalorder %s35, 3
      %p196 = por %p194, %p195
      %p197 = scmp.ne.s32.totalorder %s188, %s189
      %p198 = scmp.eq.s32.totalorder %s35, 0
      %p199 = por %p197, %p198
      %p200 = scmp.ne.s32.totalorder %s188, %s189
      %p201 = scmp.eq.s32.totalorder %s36, 3
      %p202 = por %p200, %p201
      %p204 = scmp.ne.s32.totalorder %s189, %s203
      %p205 = scmp.eq.s32.totalorder %s36, 0
      %p206 = por %p204, %p205
      %s208 = sadd.s32 %s207, 1
      %p211 = scmp.eq.s32.totalorder %s30, 3
      %p212 = scmp.ne.s32.totalorder %s207, %s209
      %p213 = scmp.eq.s32.totalorder %s30, 0
      %p214 = por %p212, %p213
      %p215 = scmp.ne.s32.totalorder %s207, %s209
      %p216 = scmp.eq.s32.totalorder %s35, 3
      %p217 = por %p215, %p216
      %p218 = scmp.ne.s32.totalorder %s209, %s210
      %p219 = scmp.eq.s32.totalorder %s35, 0
      %p220 = por %p218, %p219
      %p221 = scmp.ne.s32.totalorder %s209, %s210
      %p222 = scmp.eq.s32.totalorder %s36, 3
      %p223 = por %p221, %p222
      %p225 = scmp.ne.s32.totalorder %s210, %s224
      %p226 = scmp.eq.s32.totalorder %s36, 0
      %p227 = por %p225, %p226
      %s229 = sadd.s32 %s228, 1
      %p232 = scmp.eq.s32.totalorder %s30, 3
      %p233 = scmp.ne.s32.totalorder %s228, %s230
      %p234 = scmp.eq.s32.totalorder %s30, 0
      %p235 = por %p233, %p234
      %p236 = scmp.ne.s32.totalorder %s228, %s230
      %p237 = scmp.eq.s32.totalorder %s35, 3
      %p238 = por %p236, %p237
      %p239 = scmp.ne.s32.totalorder %s230, %s231
      %p240 = scmp.eq.s32.totalorder %s35, 0
      %p241 = por %p239, %p240
      %p242 = scmp.ne.s32.totalorder %s230, %s231
      %p243 = scmp.eq.s32.totalorder %s36, 3
      %p244 = por %p242, %p243
      %p246 = scmp.ne.s32.totalorder %s231, %s245
      %p247 = scmp.eq.s32.totalorder %s36, 0
      %p248 = por %p246, %p247
      %s250 = sadd.s32 %s249, 1
      %p253 = scmp.eq.s32.totalorder %s30, 3
      %p254 = scmp.ne.s32.totalorder %s249, %s251
      %p255 = scmp.eq.s32.totalorder %s30, 0
      %p256 = por %p254, %p255
      %p257 = scmp.ne.s32.totalorder %s249, %s251
      %p258 = scmp.eq.s32.totalorder %s35, 3
      %p259 = por %p257, %p258
      %p260 = scmp.ne.s32.totalorder %s251, %s252
      %p261 = scmp.eq.s32.totalorder %s35, 0
      %p262 = por %p260, %p261
      %p263 = scmp.ne.s32.totalorder %s251, %s252
      %p264 = scmp.eq.s32.totalorder %s36, 3
      %p265 = por %p263, %p264
      %p267 = scmp.ne.s32.totalorder %s252, %s266
      %p268 = scmp.eq.s32.totalorder %s36, 0
      %p269 = por %p267, %p268
      %s271 = sadd.s32 %s270, 1
      %p274 = scmp.eq.s32.totalorder %s30, 3
      %p275 = scmp.ne.s32.totalorder %s270, %s272
      %p276 = scmp.eq.s32.totalorder %s30, 0
      %p277 = por %p275, %p276
      %p278 = scmp.ne.s32.totalorder %s270, %s272
      %p279 = scmp.eq.s32.totalorder %s35, 3
      %p280 = por %p278, %p279
      %p281 = scmp.ne.s32.totalorder %s272, %s273
      %p282 = scmp.eq.s32.totalorder %s35, 0
      %p283 = por %p281, %p282
      %p284 = scmp.ne.s32.totalorder %s272, %s273
      %p285 = scmp.eq.s32.totalorder %s36, 3
      %p286 = por %p284, %p285
      %p288 = scmp.ne.s32.totalorder %s273, %s287
      %p289 = scmp.eq.s32.totalorder %s36, 0
      %p290 = por %p288, %p289
      %s292 = sadd.s32 %s291, 1
      %p295 = scmp.eq.s32.totalorder %s30, 3
      %p296 = scmp.ne.s32.totalorder %s291, %s293
      %p297 = scmp.eq.s32.totalorder %s30, 0
      %p298 = por %p296, %p297
      %p299 = scmp.ne.s32.totalorder %s291, %s293
      %p300 = scmp.eq.s32.totalorder %s35, 3
      %p301 = por %p299, %p300
      %p302 = scmp.ne.s32.totalorder %s293, %s294
      %p303 = scmp.eq.s32.totalorder %s35, 0
      %p304 = por %p302, %p303
      %p305 = scmp.ne.s32.totalorder %s293, %s294
      %p306 = scmp.eq.s32.totalorder %s36, 3
      %p307 = por %p305, %p306
      %p309 = scmp.ne.s32.totalorder %s294, %s308
      %p310 = scmp.eq.s32.totalorder %s36, 0
      %p311 = por %p309, %p310
      %s313 = sadd.s32 %s312, 1
      %p316 = scmp.eq.s32.totalorder %s30, 3
      %p317 = scmp.ne.s32.totalorder %s312, %s314
      %p318 = scmp.eq.s32.totalorder %s30, 0
      %p319 = por %p317, %p318
      %p320 = scmp.ne.s32.totalorder %s312, %s314
      %p321 = scmp.eq.s32.totalorder %s35, 3
      %p322 = por %p320, %p321
      %p323 = scmp.ne.s32.totalorder %s314, %s315
      %p324 = scmp.eq.s32.totalorder %s35, 0
      %p325 = por %p323, %p324
      %p326 = scmp.ne.s32.totalorder %s314, %s315
      %p327 = scmp.eq.s32.totalorder %s36, 3
      %p328 = por %p326, %p327
      %p330 = scmp.ne.s32.totalorder %s315, %s329
      %p331 = scmp.eq.s32.totalorder %s36, 0
      %p332 = por %p330, %p331
      %s334 = sadd.s32 %s333, 1
      %p337 = scmp.eq.s32.totalorder %s30, 3
      %p338 = scmp.ne.s32.totalorder %s333, %s335
      %p339 = scmp.eq.s32.totalorder %s30, 0
      %p340 = por %p338, %p339
      %p341 = scmp.ne.s32.totalorder %s333, %s335
      %p342 = scmp.eq.s32.totalorder %s35, 3
      %p343 = por %p341, %p342
      %p344 = scmp.ne.s32.totalorder %s335, %s336
      %p345 = scmp.eq.s32.totalorder %s35, 0
      %p346 = por %p344, %p345
      %p347 = scmp.ne.s32.totalorder %s335, %s336
      %p348 = scmp.eq.s32.totalorder %s36, 3
      %p349 = por %p347, %p348
      %p351 = scmp.ne.s32.totalorder %s336, %s350
      %p352 = scmp.eq.s32.totalorder %s36, 0
      %p353 = por %p351, %p352
      %s355 = sadd.s32 %s354, 1
      %p358 = scmp.eq.s32.totalorder %s30, 3
      %p359 = scmp.ne.s32.totalorder %s354, %s356
      %p360 = scmp.eq.s32.totalorder %s30, 0
      %p361 = por %p359, %p360
      %p362 = scmp.ne.s32.totalorder %s354, %s356
      %p363 = scmp.eq.s32.totalorder %s35, 3
      %p364 = por %p362, %p363
      %p365 = scmp.ne.s32.totalorder %s356, %s357
      %p366 = scmp.eq.s32.totalorder %s35, 0
      %p367 = por %p365, %p366
      %p368 = scmp.ne.s32.totalorder %s356, %s357
      %p369 = scmp.eq.s32.totalorder %s36, 3
      %p370 = por %p368, %p369
      %p372 = scmp.ne.s32.totalorder %s357, %s371
      %p373 = scmp.eq.s32.totalorder %s36, 0
      %p374 = por %p372, %p373
      %s376 = sadd.s32 %s375, 1
      %p379 = scmp.eq.s32.totalorder %s30, 3
      %p380 = scmp.ne.s32.totalorder %s375, %s377
      %p381 = scmp.eq.s32.totalorder %s30, 0
      %p382 = por %p380, %p381
      %p383 = scmp.ne.s32.totalorder %s375, %s377
      %p384 = scmp.eq.s32.totalorder %s35, 3
      %p385 = por %p383, %p384
      %p386 = scmp.ne.s32.totalorder %s377, %s378
      %p387 = scmp.eq.s32.totalorder %s35, 0
      %p388 = por %p386, %p387
      %p389 = scmp.ne.s32.totalorder %s377, %s378
      %p390 = scmp.eq.s32.totalorder %s36, 3
      %p391 = por %p389, %p390
      %p393 = scmp.ne.s32.totalorder %s378, %s392
      %p394 = scmp.eq.s32.totalorder %s36, 0
      %p395 = por %p393, %p394
      %s397 = sadd.s32 %s396, 1
      %p400 = scmp.eq.s32.totalorder %s30, 3
      %p401 = scmp.ne.s32.totalorder %s396, %s398
      %p402 = scmp.eq.s32.totalorder %s30, 0
      %p403 = por %p401, %p402
      %p404 = scmp.ne.s32.totalorder %s396, %s398
      %p405 = scmp.eq.s32.totalorder %s35, 3
      %p406 = por %p404, %p405
      %p407 = scmp.ne.s32.totalorder %s398, %s399
      %p408 = scmp.eq.s32.totalorder %s35, 0
      %p409 = por %p407, %p408
      %p410 = scmp.ne.s32.totalorder %s398, %s399
      %p411 = scmp.eq.s32.totalorder %s36, 3
      %p412 = por %p410, %p411
      %p414 = scmp.ne.s32.totalorder %s399, %s413
      %p415 = scmp.eq.s32.totalorder %s36, 0
      %p416 = por %p414, %p415
      %s417 = ssub.s32 %s37, %s49
      %s418 = ssub.s32 %s38, %s45
      %s419 = sor.u32 %s417, %s418
      %p420 = scmp.eq.s32.totalorder %s419, 0
      %s422 = sadd.s32 %s421, 1
      %s423 = scalar_select %p420, %s421, %s422
      %p426 = pneg %p420
      %p427 = scmp.eq.s32.totalorder %s30, 3
      %p428 = por %p426, %p427
      %p429 = scmp.ne.s32.totalorder %s421, %s424
      %p430 = scmp.eq.s32.totalorder %s30, 0
      %p431 = por %p429, %p430
      %p432 = scmp.ne.s32.totalorder %s421, %s424
      %p433 = scmp.eq.s32.totalorder %s35, 3
      %p434 = por %p432, %p433
      %p435 = scmp.ne.s32.totalorder %s424, %s425
      %p436 = scmp.eq.s32.totalorder %s35, 0
      %p437 = por %p435, %p436
      %p438 = scmp.ne.s32.totalorder %s424, %s425
      %p439 = scmp.eq.s32.totalorder %s36, 3
      %p440 = por %p438, %p439
      %p442 = scmp.ne.s32.totalorder %s425, %s441
      %p443 = scmp.eq.s32.totalorder %s36, 0
      %p444 = por %p442, %p443
      %p445 = scmp.le.s32.totalorder 1, %s30
      %p446 = scmp.lt.s32.totalorder %s30, 5
      %p447 = pnand %p445, %p446
      %p448 = pneg %p447
      // Predicated region
      $region9: #{tpu_custom_call.1} parent=5 // pred_check
        _
      $region10: #{tpu_custom_call.1} parent=5 // pred_check_branch
        %450 = sbr.rel (%p447) target = $region12
      $region11: #{tpu_custom_call.1} parent=5 // pred_region
        %s451 = ssub.s32 %s30, 1
        // Predicated region
        $region13: #{tpu_custom_call.1} parent=11 // pred_check
          %p452 = pneg %p115
        $region14: #{tpu_custom_call.1} parent=11 // pred_check_branch
          %454 = sbr.rel (%p452) target = $region16
        $region15: #{tpu_custom_call.1} parent=11 // pred_region
          %s456 = ssub.s32 256, 256
          %457 = vsyncadd [#allocation6], %s456
          %s458 = sshll.u32 [#allocation5], 4
          %s459 = int_to_ptr.vmem [resolvable:$true] %s458
          %464 = dma.hbm_to_vmem [thread:$0]  %s2, 256, %s459, [#allocation6], 128, 128, 8
        $region16: #{tpu_custom_call.1} parent=11 // pred_fallthru
          _
        // Predicated region
        $region17: #{tpu_custom_call.1} parent=11 // pred_check
          %p465 = pneg %p136
        $region18: #{tpu_custom_call.1} parent=11 // pred_check_branch
          %467 = sbr.rel (%p465) target = $region20
        $region19: #{tpu_custom_call.1} parent=11 // pred_region
          _
        $region20: #{tpu_custom_call.1} parent=11 // pred_fallthru
          _
        // Predicated region
        $region21: #{tpu_custom_call.1} parent=11 // pred_check
          %p468 = pneg %p157
        $region22: #{tpu_custom_call.1} parent=11 // pred_check_branch
          %470 = sbr.rel (%p468) target = $region24
        $region23: #{tpu_custom_call.1} parent=11 // pred_region
          _
        $region24: #{tpu_custom_call.1} parent=11 // pred_fallthru
          _
        // Predicated region
        $region25: #{tpu_custom_call.1} parent=11 // pred_check
          %p471 = pneg %p178
        $region26: #{tpu_custom_call.1} parent=11 // pred_check_branch
          %473 = sbr.rel (%p471) target = $region28
        $region27: #{tpu_custom_call.1} parent=11 // pred_region
          _
        $region28: #{tpu_custom_call.1} parent=11 // pred_fallthru
          _
        // Predicated region
        $region29: #{tpu_custom_call.1} parent=11 // pred_check
          %p474 = pneg %p199
        $region30: #{tpu_custom_call.1} parent=11 // pred_check_branch
          %476 = sbr.rel (%p474) target = $region32
        $region31: #{tpu_custom_call.1} parent=11 // pred_region
          _
        $region32: #{tpu_custom_call.1} parent=11 // pred_fallthru
          _
        // Predicated region
        $region33: #{tpu_custom_call.1} parent=11 // pred_check
          %p477 = pneg %p220
        $region34: #{tpu_custom_call.1} parent=11 // pred_check_branch
          %479 = sbr.rel (%p477) target = $region36
        $region35: #{tpu_custom_call.1} parent=11 // pred_region
          _
        $region36: #{tpu_custom_call.1} parent=11 // pred_fallthru
          _
        // Predicated region
        $region37: #{tpu_custom_call.1} parent=11 // pred_check
          %p480 = pneg %p241
        $region38: #{tpu_custom_call.1} parent=11 // pred_check_branch
          %482 = sbr.rel (%p480) target = $region40
        $region39: #{tpu_custom_call.1} parent=11 // pred_region
          _
        $region40: #{tpu_custom_call.1} parent=11 // pred_fallthru
          _
        // Predicated region
        $region41: #{tpu_custom_call.1} parent=11 // pred_check
          %p483 = pneg %p262
        $region42: #{tpu_custom_call.1} parent=11 // pred_check_branch
          %485 = sbr.rel (%p483) target = $region44
        $region43: #{tpu_custom_call.1} parent=11 // pred_region
          _
        $region44: #{tpu_custom_call.1} parent=11 // pred_fallthru
          _
        // Predicated region
        $region45: #{tpu_custom_call.1} parent=11 // pred_check
          %p486 = pneg %p283
        $region46: #{tpu_custom_call.1} parent=11 // pred_check_branch
          %488 = sbr.rel (%p486) target = $region48
        $region47: #{tpu_custom_call.1} parent=11 // pred_region
          _
        $region48: #{tpu_custom_call.1} parent=11 // pred_fallthru
          _
        // Predicated region
        $region49: #{tpu_custom_call.1} parent=11 // pred_check
          %p489 = pneg %p304
        $region50: #{tpu_custom_call.1} parent=11 // pred_check_branch
          %491 = sbr.rel (%p489) target = $region52
        $region51: #{tpu_custom_call.1} parent=11 // pred_region
          _
        $region52: #{tpu_custom_call.1} parent=11 // pred_fallthru
          _
        // Predicated region
        $region53: #{tpu_custom_call.1} parent=11 // pred_check
          %p492 = pneg %p325
        $region54: #{tpu_custom_call.1} parent=11 // pred_check_branch
          %494 = sbr.rel (%p492) target = $region56
        $region55: #{tpu_custom_call.1} parent=11 // pred_region
          _
        $region56: #{tpu_custom_call.1} parent=11 // pred_fallthru
          _
        // Predicated region
        $region57: #{tpu_custom_call.1} parent=11 // pred_check
          %p495 = pneg %p346
        $region58: #{tpu_custom_call.1} parent=11 // pred_check_branch
          %497 = sbr.rel (%p495) target = $region60
        $region59: #{tpu_custom_call.1} parent=11 // pred_region
          _
        $region60: #{tpu_custom_call.1} parent=11 // pred_fallthru
          _
        // Predicated region
        $region61: #{tpu_custom_call.1} parent=11 // pred_check
          %p498 = pneg %p367
        $region62: #{tpu_custom_call.1} parent=11 // pred_check_branch
          %500 = sbr.rel (%p498) target = $region64
        $region63: #{tpu_custom_call.1} parent=11 // pred_region
          _
        $region64: #{tpu_custom_call.1} parent=11 // pred_fallthru
          _
        // Predicated region
        $region65: #{tpu_custom_call.1} parent=11 // pred_check
          %p501 = pneg %p388
        $region66: #{tpu_custom_call.1} parent=11 // pred_check_branch
          %503 = sbr.rel (%p501) target = $region68
        $region67: #{tpu_custom_call.1} parent=11 // pred_region
          _
        $region68: #{tpu_custom_call.1} parent=11 // pred_fallthru
          _
        // Predicated region
        $region69: #{tpu_custom_call.1} parent=11 // pred_check
          %p504 = pneg %p409
        $region70: #{tpu_custom_call.1} parent=11 // pred_check_branch
          %506 = sbr.rel (%p504) target = $region72
        $region71: #{tpu_custom_call.1} parent=11 // pred_region
          _
        $region72: #{tpu_custom_call.1} parent=11 // pred_fallthru
          _
      $region12: #{tpu_custom_call.1} parent=5 // pred_fallthru
        _
      %p507 = scmp.lt.s32.totalorder %s30, 4
      // Predicated region
      $region73: #{tpu_custom_call.1} parent=5 // pred_check
        %p508 = pneg %p507
      $region74: #{tpu_custom_call.1} parent=5 // pred_check_branch
        %510 = sbr.rel (%p508) target = $region76
      $region75: #{tpu_custom_call.1} parent=5 // pred_region
        // Predicated region
        $region77: #{tpu_custom_call.1} parent=75 // pred_check
          %p511 = pneg %p62
        $region78: #{tpu_custom_call.1} parent=75 // pred_check_branch
          %513 = sbr.rel (%p511) target = $region80
        $region79: #{tpu_custom_call.1} parent=75 // pred_region
          %p514 = scmp.lt.s32.totalorder %s37, 1
          %s515 = scalar_select %p514, %s37, 1
          %s516 = smul.addr %s515, 2
          %s517 = smul.addr %s516, 8
          %s518 = scalar_lea.vmem %s0, %s517
        $region80: #{tpu_custom_call.1} parent=75 // pred_fallthru
          _
        // Predicated region
        $region81: #{tpu_custom_call.1} parent=75 // pred_check
          %p519 = pneg %p88
        $region82: #{tpu_custom_call.1} parent=75 // pred_check_branch
          %521 = sbr.rel (%p519) target = $region84
        $region83: #{tpu_custom_call.1} parent=75 // pred_region
          %s522 = sand.u32 %s78, 1
          %s523 = scalar_lea.sflag [#allocation3], %s522
          %s524 = sand.u32 %s78, 1
          %s525 = scalar_lea.vmem [#allocation2], %s524
          %s527 = ssub.s32 16, 16
          %528 = vsyncadd %s523, %s527
          %s529 = smul.addr %s37, 16
          %s530 = scalar_lea.hbm %s1, %s529
          %s532 = sshll.u32 %s525, 4
          %s533 = int_to_ptr.vmem [resolvable:$true] %s532
          %535 = dma.hbm_to_vmem [thread:$0]  %s530, 16, %s533, %s523
        $region84: #{tpu_custom_call.1} parent=75 // pred_fallthru
          _
      $region76: #{tpu_custom_call.1} parent=5 // pred_fallthru
        _
      %p536 = scmp.le.s32.totalorder 1, %s30
      %p537 = scmp.lt.s32.totalorder %s30, 5
      %p538 = pnand %p536, %p537
      %p539 = pneg %p538
      // Predicated region
      $region85: #{tpu_custom_call.1} parent=5 // pred_check
        _
      $region86: #{tpu_custom_call.1} parent=5 // pred_check_branch
        %541 = sbr.rel (%p538) target = $region88
      $region87: #{tpu_custom_call.1} parent=5 // pred_region
        %s542 = ssub.s32 %s30, 1
        %s543 = sand.u32 %s81, 1
        %s544 = scalar_lea.sflag [#allocation3], %s543
        %s545 = sand.u32 %s81, 1
        %s546 = scalar_lea.vmem [#allocation2], %s545
        // Predicated region
        $region89: #{tpu_custom_call.1} parent=87 // pred_check
          %p547 = pneg %p94
        $region90: #{tpu_custom_call.1} parent=87 // pred_check_branch
          %549 = sbr.rel (%p547) target = $region92
        $region91: #{tpu_custom_call.1} parent=87 // pred_region
          %550 = dma.done %s544, 16
        $region92: #{tpu_custom_call.1} parent=87 // pred_fallthru
          _
        // Predicated region
        $region93: #{tpu_custom_call.1} parent=87 // pred_check
          %p551 = pneg %p115
        $region94: #{tpu_custom_call.1} parent=87 // pred_check_branch
          %553 = sbr.rel (%p551) target = $region96
        $region95: #{tpu_custom_call.1} parent=87 // pred_region
          %554 = dma.done [#allocation6], 256
        $region96: #{tpu_custom_call.1} parent=87 // pred_fallthru
          _
        %p555 = scmp.lt.s32.totalorder %s39, 1
        %s556 = scalar_select %p555, %s39, 1
        %s557 = smul.addr %s556, 2
        %s558 = smul.addr %s557, 8
        %s559 = scalar_lea.vmem %s0, %s558
        %p560 = pneg %p68
        %p561 = pneg %p65
        %s562 = sand.u32 %s81, 1
        %s563 = scalar_lea.sflag [#allocation3], %s562
        %s564 = sand.u32 %s81, 1
        %s565 = scalar_lea.vmem [#allocation2], %s564
        %p566 = pneg %p94
        %p567 = pneg %p91
        %p568 = pneg %p115
        %p569 = pneg %p112
        %p570 = pneg %p136
        %p571 = pneg %p133
        %p572 = pneg %p157
        %p573 = pneg %p154
        %p574 = pneg %p178
        %p575 = pneg %p175
        %p576 = pneg %p199
        %p577 = pneg %p196
        %p578 = pneg %p220
        %p579 = pneg %p217
        %p580 = pneg %p241
        %p581 = pneg %p238
        %p582 = pneg %p262
        %p583 = pneg %p259
        %p584 = pneg %p283
        %p585 = pneg %p280
        %p586 = pneg %p304
        %p587 = pneg %p301
        %p588 = pneg %p325
        %p589 = pneg %p322
        %p590 = pneg %p346
        %p591 = pneg %p343
        %p592 = pneg %p367
        %p593 = pneg %p364
        %p594 = pneg %p388
        %p595 = pneg %p385
        %p596 = pneg %p409
        %p597 = pneg %p406
        %p598 = pneg %p437
        %p599 = pneg %p434
        %s600 = sand.u32 %s424, 1
        %s601 = scalar_lea.sflag [#allocation4], %s600
        %s602 = sand.u32 %s424, 1
        %s603 = smul.addr %s602, 8
        %s604 = scalar_lea.vmem [#allocation7], %s603
        %p605 = scmp.lt.s32.totalorder %s39, 1
        %s606 = scalar_select %p605, %s39, 1
        %s607 = smul.addr %s606, 2
        %s608 = smul.addr %s607, 8
        %s609 = scalar_lea.vmem %s0, %s608
        %s611 = smul.u32 %s40, 8
        %v612 = vld [vmem:[%s3] sm:$0x1]
        %v613 = vld [vmem:[%s4] sm:$0x1]
        %v614 = vld [vmem:[%s609] sm:$0xff]
        %v615 = vld [vmem:[%s609 + $0x8] sm:$0xff]
        %v616 = vld [vmem:[#allocation5] sm:$0xff]
        %v617 = vld [vmem:[#allocation5 + $0x8] sm:$0xff]
        %v618 = vadd.f32 %v614, %v616
        %v619 = vadd.f32 %v615, %v617
        %vm620 = vcmask 523264
        %v621 = vsel %vm620, %v618, 0.0
        %622 = vadd.xlane.f32.xlu0 %v621
        %v623 = vpop.xlane.xlu0 %622
        %v624 = vsel %vm620, %v619, 0.0
        %625 = vadd.xlane.f32.xlu0 %v624
        %v626 = vpop.xlane.xlu0 %625
        %v627 = vrcp.pop 64.0
        %v628 = vmul.f32 %v623, %v627
        %v629 = vmul.f32 %v626, %v627
        %v630 = vsub.f32 %v618, %v628
        %v631 = vsub.f32 %v619, %v629
        %v632 = vmul.f32 %v630, %v630
        %v633 = vmul.f32 %v631, %v631
        %v634 = vsel %vm620, %v632, 0.0
        %635 = vadd.xlane.f32.xlu0 %v634
        %v636 = vpop.xlane.xlu0 %635
        %v637 = vsel %vm620, %v633, 0.0
        %638 = vadd.xlane.f32.xlu0 %v637
        %v639 = vpop.xlane.xlu0 %638
        %v640 = vmul.f32 %v636, %v627
        %v641 = vmul.f32 %v639, %v627
        %v642 = vadd.f32 %v640, 1e-05
        %v643 = vadd.f32 %v641, 1e-05
        %v644 = vrsqrt.pop %v642
        %v645 = vrsqrt.pop %v643
        %v646 = vmul.f32 %v630, %v644
        %v647 = vmul.f32 %v631, %v645
        %v649 = vlaneseq
        %v650 = vshrl.u32 %v649, 7
        %v651 = vsub.s32 0, %v650
        %v652 = vrot.slane %v612, %v651
        %v654 = vmul.f32 %v646, %v652
        %v655 = vmul.f32 %v647, %v652
        %v657 = vlaneseq
        %v658 = vshrl.u32 %v657, 7
        %v659 = vsub.s32 0, %v658
        %v660 = vrot.slane %v613, %v659
        %v662 = vadd.f32 %v654, %v660
        %v663 = vadd.f32 %v655, %v660
        %v664 = vpack.c.bf16 %v663, %v662
        %v665 = vld [vmem:[%s7] sm:$0xf]
        %v666 = vld [vmem:[%s7 + $0x4] sm:$0xf]
        %v667 = vld [vmem:[%s7 + $0x8] sm:$0xf]
        %v668 = vld [vmem:[%s7 + $0xc] sm:$0xf]
        %v669 = vld [vmem:[%s7 + $0x10] sm:$0xf]
        %v670 = vld [vmem:[%s7 + $0x14] sm:$0xf]
        %v671 = vld [vmem:[%s7 + $0x18] sm:$0xf]
        %v672 = vld [vmem:[%s7 + $0x1c] sm:$0xf]
        %v673 = vld [vmem:[%s8] sm:$0x1]
        %v675 = vlaneseq
        %v676 = vshrl.u32 %v675, 7
        %v677 = vsub.s32 0, %v676
        %v678 = vrot.slane %v673, %v677
        %v688 = vunpack.c.l.b16 %v665
        %v689 = vunpack.c.l.b16 %v666
        %v690 = vunpack.c.l.b16 %v667
        %v691 = vunpack.c.l.b16 %v668
        %v692 = vunpack.c.l.b16 %v669
        %v693 = vunpack.c.l.b16 %v670
        %v694 = vunpack.c.l.b16 %v671
        %v695 = vunpack.c.l.b16 %v672
        %v696 = vpack.c.b16 %v689, %v688
        %v697 = vpack.c.b16 %v691, %v690
        %v698 = vpack.c.b16 %v693, %v692
        %v699 = vpack.c.b16 %v695, %v694
        %v705 = vsel %vm620, %v664, 0
        %707 = vmatprep.subr.bf16.mxu0 0
        %708 = vmatpush1.bf16.msra.mxu0 0
        %709 = vmatprep.subr.bf16.mxu0 0
        %710 = vmatpush1.bf16.msra.mxu0 0
        %711 = vmatprep.subr.bf16.mxu0 0
        %712 = vmatpush1.bf16.msra.mxu0 0
        %713 = vmatprep.subr.bf16.mxu0 0
        %714 = vmatpush1.bf16.msra.mxu0 0
        %715 = vmatprep.subr.bf16.mxu0 0
        %716 = vmatpush1.bf16.msra.mxu0 %v699
        %717 = vmatprep.subr.bf16.mxu0 0
        %718 = vmatpush1.bf16.msra.mxu0 %v698
        %719 = vmatprep.subr.bf16.mxu0 0
        %720 = vmatpush1.bf16.msra.mxu0 %v697
        %721 = vmatprep.subr.bf16.mxu0 0
        %722 = vmatpush1.bf16.msra.mxu0 %v696
        %723 = vmatprep.subr.bf16.mxu0 0
        %724 = vmatpush2.bf16.msra.mxu0 0
        %725 = vmatprep.subr.bf16.mxu0 0
        %726 = vmatpush2.bf16.msra.mxu0 0
        %727 = vmatprep.subr.bf16.mxu0 0
        %728 = vmatpush2.bf16.msra.mxu0 0
        %729 = vmatprep.subr.bf16.mxu0 0
        %730 = vmatpush2.bf16.msra.mxu0 0
        %731 = vmatprep.subr.bf16.mxu0 0
        %732 = vmatpush2.bf16.msra.mxu0 0
        %733 = vmatprep.subr.bf16.mxu0 0
        %734 = vmatpush2.bf16.msra.mxu0 0
        %735 = vmatprep.subr.bf16.mxu0 0
        %736 = vmatpush2.bf16.msra.mxu0 0
        %737 = vmatprep.subr.bf16.mxu0 0
        %738 = vmatpush2.bf16.msra.mxu0 0
        %739 = vmatprep.mubr.bf16.mxu0 0
        %740 = vmatmul.mubr.bf16.gmra.mxu0 %v705
        %v741 = vpop.f32.mrf.mxu0
        %v742 = vadd.f32 %v678, %v741
        %v743 = vpop.f32.mrf.mxu0
        %v744 = vpop.f32.mrf.mxu0
        %v745 = vadd.f32 %v678, %v744
        %v746 = vpop.f32.mrf.mxu0
        %747 = vdwg.mxu0
        %v748 = vpack.c.bf16 %v745, %v742
        %s749 = scalar_lea.vmem %s609, %s611
        %v750 = vld [vmem:[%s749] sm:$0xff]
        %s751 = scalar_lea.vmem [#allocation5], %s611
        %v752 = vld [vmem:[%s751] sm:$0xff]
        %v753 = vadd.f32 %v750, %v752
        %v754 = vsel %vm620, %v753, 0.0
        %755 = vadd.xlane.f32.xlu0 %v754
        %v756 = vpop.xlane.xlu0 %755
        %v757 = vmul.f32 %v756, %v627
        %v758 = vsub.f32 %v753, %v757
        %v759 = vmul.f32 %v758, %v758
        %v760 = vsel %vm620, %v759, 0.0
        %761 = vadd.xlane.f32.xlu0 %v760
        %v762 = vpop.xlane.xlu0 %761
        %v763 = vmul.f32 %v762, %v627
        %v764 = vadd.f32 %v763, 1e-05
        %v765 = vrsqrt.pop %v764
        %v766 = vmul.f32 %v758, %v765
        %v767 = vmul.f32 %v766, %v652
        %v768 = vadd.f32 %v767, %v660
        %v769 = vpack.c.bf16 %v768, %v768
        %v770 = vld [vmem:[%s5] sm:$0xf]
        %v771 = vld [vmem:[%s5 + $0x4] sm:$0xf]
        %v772 = vld [vmem:[%s5 + $0x8] sm:$0xf]
        %v773 = vld [vmem:[%s5 + $0xc] sm:$0xf]
        %v774 = vld [vmem:[%s5 + $0x10] sm:$0xf]
        %v775 = vld [vmem:[%s5 + $0x14] sm:$0xf]
        %v776 = vld [vmem:[%s5 + $0x18] sm:$0xf]
        %v777 = vld [vmem:[%s5 + $0x1c] sm:$0xf]
        %v778 = vld [vmem:[%s6] sm:$0x1]
        %v780 = vlaneseq
        %v781 = vshrl.u32 %v780, 7
        %v782 = vsub.s32 0, %v781
        %v783 = vrot.slane %v778, %v782
        %v793 = vunpack.c.l.b16 %v770
        %v794 = vunpack.c.l.b16 %v771
        %v795 = vunpack.c.l.b16 %v772
        %v796 = vunpack.c.l.b16 %v773
        %v797 = vunpack.c.l.b16 %v774
        %v798 = vunpack.c.l.b16 %v775
        %v799 = vunpack.c.l.b16 %v776
        %v800 = vunpack.c.l.b16 %v777
        %v801 = vpack.c.b16 %v794, %v793
        %v802 = vpack.c.b16 %v796, %v795
        %v803 = vpack.c.b16 %v798, %v797
        %v804 = vpack.c.b16 %v800, %v799
        %v810 = vsel %vm620, %v769, 0
        %812 = vmatprep.subr.bf16.mxu0 0
        %813 = vmatpush1.bf16.msra.mxu0 0
        %814 = vmatprep.subr.bf16.mxu0 0
        %815 = vmatpush1.bf16.msra.mxu0 0
        %816 = vmatprep.subr.bf16.mxu0 0
        %817 = vmatpush1.bf16.msra.mxu0 0
        %818 = vmatprep.subr.bf16.mxu0 0
        %819 = vmatpush1.bf16.msra.mxu0 0
        %820 = vmatprep.subr.bf16.mxu0 0
        %821 = vmatpush1.bf16.msra.mxu0 %v804
        %822 = vmatprep.subr.bf16.mxu0 0
        %823 = vmatpush1.bf16.msra.mxu0 %v803
        %824 = vmatprep.subr.bf16.mxu0 0
        %825 = vmatpush1.bf16.msra.mxu0 %v802
        %826 = vmatprep.subr.bf16.mxu0 0
        %827 = vmatpush1.bf16.msra.mxu0 %v801
        %828 = vmatprep.subr.bf16.mxu0 0
        %829 = vmatpush2.bf16.msra.mxu0 0
        %830 = vmatprep.subr.bf16.mxu0 0
        %831 = vmatpush2.bf16.msra.mxu0 0
        %832 = vmatprep.subr.bf16.mxu0 0
        %833 = vmatpush2.bf16.msra.mxu0 0
        %834 = vmatprep.subr.bf16.mxu0 0
        %835 = vmatpush2.bf16.msra.mxu0 0
        %836 = vmatprep.subr.bf16.mxu0 0
        %837 = vmatpush2.bf16.msra.mxu0 0
        %838 = vmatprep.subr.bf16.mxu0 0
        %839 = vmatpush2.bf16.msra.mxu0 0
        %840 = vmatprep.subr.bf16.mxu0 0
        %841 = vmatpush2.bf16.msra.mxu0 0
        %842 = vmatprep.subr.bf16.mxu0 0
        %843 = vmatpush2.bf16.msra.mxu0 0
        %844 = vmatprep.mubr.bf16.mxu0 0
        %845 = vmatmul.mubr.bf16.gmra.mxu0 %v810
        %v846 = vpop.f32.mrf.mxu0
        %v847 = vadd.f32 %v783, %v846
        %v848 = vpop.f32.mrf.mxu0
        %v849 = vpop.f32.mrf.mxu0
        %v850 = vpop.f32.mrf.mxu0
        %851 = vdwg.mxu0
        %v852 = vpack.c.bf16 %v847, %v847
        %v853 = vlaneseq
        %v854 = vshrl.u32 %v853, 7
        %v855 = vstv %s611
        %v856 = vadd.s32 %v854, %v855
        %v857 = vlaneseq
        %v858 = vand.u32 %v857, 127
        %vm859 = vcmp.ge.s32.totalorder %v856, %v858
        %v860 = vsel %vm859, 0.0, -1e+09
        %v861 = vld [vmem:[%s546] sm:$0x1]
        %v863 = vlaneseq
        %v864 = vshrl.u32 %v863, 7
        %v865 = vsub.s32 0, %v864
        %v866 = vrot.slane %v861, %v865
        %v868 = vadd.f32 %v860, %v866
        %v869 = vld [vmem:[%s9] sm:$0xf]
        %v870 = vld [vmem:[%s9 + $0x4] sm:$0xf]
        %v871 = vld [vmem:[%s9 + $0x8] sm:$0xf]
        %v872 = vld [vmem:[%s9 + $0xc] sm:$0xf]
        %v873 = vld [vmem:[%s9 + $0x10] sm:$0xf]
        %v874 = vld [vmem:[%s9 + $0x14] sm:$0xf]
        %v875 = vld [vmem:[%s9 + $0x18] sm:$0xf]
        %v876 = vld [vmem:[%s9 + $0x1c] sm:$0xf]
        %vm877 = vcmask 130048
        %v879 = vsel %vm877, %v852, 0
        %v882 = vsel %vm877, %v748, 0
        %884 = vmatprep.subr.bf16.mxu0 0
        %885 = vmatpush1.bf16.xpose.msra.mxu0 0
        %886 = vmatprep.subr.bf16.mxu0 0
        %887 = vmatpush1.bf16.xpose.msra.mxu0 0
        %888 = vmatprep.subr.bf16.mxu0 0
        %889 = vmatpush1.bf16.xpose.msra.mxu0 0
        %890 = vmatprep.subr.bf16.mxu0 0
        %891 = vmatpush1.bf16.xpose.msra.mxu0 0
        %892 = vmatprep.subr.bf16.mxu0 0
        %893 = vmatpush1.bf16.xpose.msra.mxu0 0
        %894 = vmatprep.subr.bf16.mxu0 0
        %895 = vmatpush1.bf16.xpose.msra.mxu0 0
        %896 = vmatprep.subr.bf16.mxu0 0
        %897 = vmatpush1.bf16.xpose.msra.mxu0 0
        %898 = vmatprep.subr.bf16.mxu0 0
        %899 = vmatpush1.bf16.xpose.msra.mxu0 %v882
        %900 = vmatprep.subr.bf16.mxu0 0
        %901 = vmatpush2.bf16.xpose.msra.mxu0 0
        %902 = vmatprep.subr.bf16.mxu0 0
        %903 = vmatpush2.bf16.xpose.msra.mxu0 0
        %904 = vmatprep.subr.bf16.mxu0 0
        %905 = vmatpush2.bf16.xpose.msra.mxu0 0
        %906 = vmatprep.subr.bf16.mxu0 0
        %907 = vmatpush2.bf16.xpose.msra.mxu0 0
        %908 = vmatprep.subr.bf16.mxu0 0
        %909 = vmatpush2.bf16.xpose.msra.mxu0 0
        %910 = vmatprep.subr.bf16.mxu0 0
        %911 = vmatpush2.bf16.xpose.msra.mxu0 0
        %912 = vmatprep.subr.bf16.mxu0 0
        %913 = vmatpush2.bf16.xpose.msra.mxu0 0
        %914 = vmatprep.subr.bf16.mxu0 0
        %915 = vmatpush2.bf16.xpose.msra.mxu0 0
        %916 = vmatprep.mubr.bf16.mxu0 0
        %917 = vmatmul.mubr.bf16.gmra.mxu0 %v879
        %v918 = vpop.f32.mrf.mxu0
        %v919 = vadd.f32 %v868, %v918
        %v920 = vpop.f32.mrf.mxu0
        %v921 = vpop.f32.mrf.mxu0
        %v922 = vpop.f32.mrf.mxu0
        %923 = vdwg.mxu0
        %v924 = vsel %vm877, %v919, -inf
        %925 = vmax.xlane.f32.xlu0 %v924
        %v926 = vpop.xlane.xlu0 %925
        %v927 = vsub.f32 %v919, %v926
        %v928 = vmul.f32 %v927, 1.442695
        %v929 = vpow.pop %v928
        %v930 = vsel %vm877, %v929, 0.0
        %931 = vadd.xlane.f32.xlu0 %v930
        %v932 = vpop.xlane.xlu0 %931
        %v933 = vpack.c.bf16 %v929, %v929
        %935 = vrot.lane.b32.xlu0 %v748, 64
        %v936 = vpop.permute.xlu0 %935
        %v939 = vsel %vm877, %v933, 0
        %941 = vmatprep.subr.bf16.mxu0 0
        %942 = vmatpush1.bf16.msra.mxu0 0
        %943 = vmatprep.subr.bf16.mxu0 0
        %944 = vmatpush1.bf16.msra.mxu0 0
        %945 = vmatprep.subr.bf16.mxu0 0
        %946 = vmatpush1.bf16.msra.mxu0 0
        %947 = vmatprep.subr.bf16.mxu0 0
        %948 = vmatpush1.bf16.msra.mxu0 0
        %949 = vmatprep.subr.bf16.mxu0 0
        %950 = vmatpush1.bf16.msra.mxu0 0
        %951 = vmatprep.subr.bf16.mxu0 0
        %952 = vmatpush1.bf16.msra.mxu0 0
        %953 = vmatprep.subr.bf16.mxu0 0
        %954 = vmatpush1.bf16.msra.mxu0 0
        %955 = vmatprep.subr.bf16.mxu0 0
        %956 = vmatpush1.bf16.msra.mxu0 %v936
        %957 = vmatprep.subr.bf16.mxu0 0
        %958 = vmatpush2.bf16.msra.mxu0 0
        %959 = vmatprep.subr.bf16.mxu0 0
        %960 = vmatpush2.bf16.msra.mxu0 0
        %961 = vmatprep.subr.bf16.mxu0 0
        %962 = vmatpush2.bf16.msra.mxu0 0
        %963 = vmatprep.subr.bf16.mxu0 0
        %964 = vmatpush2.bf16.msra.mxu0 0
        %965 = vmatprep.subr.bf16.mxu0 0
        %966 = vmatpush2.bf16.msra.mxu0 0
        %967 = vmatprep.subr.bf16.mxu0 0
        %968 = vmatpush2.bf16.msra.mxu0 0
        %969 = vmatprep.subr.bf16.mxu0 0
        %970 = vmatpush2.bf16.msra.mxu0 0
        %971 = vmatprep.subr.bf16.mxu0 0
        %972 = vmatpush2.bf16.msra.mxu0 0
        %973 = vmatprep.mubr.bf16.mxu0 0
        %974 = vmatmul.mubr.bf16.gmra.mxu0 %v939
        %v975 = vpop.f32.mrf.mxu0
        %v976 = vadd.f32 0.0, %v975
        %v977 = vpop.f32.mrf.mxu0
        %v978 = vpop.f32.mrf.mxu0
        %v979 = vpop.f32.mrf.mxu0
        %980 = vdwg.mxu0
        %v981 = vrcp.pop %v932
        %v982 = vmul.f32 %v976, %v981
        %v983 = vpack.c.bf16 %v982, %v982
        %985 = vrot.lane.b32.xlu0 %v852, 112
        %v986 = vpop.permute.xlu0 %985
        %987 = vrot.lane.b32.xlu0 %v748, 112
        %v988 = vpop.permute.xlu0 %987
        %v990 = vsel %vm877, %v986, 0
        %v993 = vsel %vm877, %v988, 0
        %995 = vmatprep.subr.bf16.mxu0 0
        %996 = vmatpush1.bf16.xpose.msra.mxu0 0
        %997 = vmatprep.subr.bf16.mxu0 0
        %998 = vmatpush1.bf16.xpose.msra.mxu0 0
        %999 = vmatprep.subr.bf16.mxu0 0
        %1000 = vmatpush1.bf16.xpose.msra.mxu0 0
        %1001 = vmatprep.subr.bf16.mxu0 0
        %1002 = vmatpush1.bf16.xpose.msra.mxu0 0
        %1003 = vmatprep.subr.bf16.mxu0 0
        %1004 = vmatpush1.bf16.xpose.msra.mxu0 0
        %1005 = vmatprep.subr.bf16.mxu0 0
        %1006 = vmatpush1.bf16.xpose.msra.mxu0 0
        %1007 = vmatprep.subr.bf16.mxu0 0
        %1008 = vmatpush1.bf16.xpose.msra.mxu0 0
        %1009 = vmatprep.subr.bf16.mxu0 0
        %1010 = vmatpush1.bf16.xpose.msra.mxu0 %v993
        %1011 = vmatprep.subr.bf16.mxu0 0
        %1012 = vmatpush2.bf16.xpose.msra.mxu0 0
        %1013 = vmatprep.subr.bf16.mxu0 0
        %1014 = vmatpush2.bf16.xpose.msra.mxu0 0
        %1015 = vmatprep.subr.bf16.mxu0 0
        %1016 = vmatpush2.bf16.xpose.msra.mxu0 0
        %1017 = vmatprep.subr.bf16.mxu0 0
        %1018 = vmatpush2.bf16.xpose.msra.mxu0 0
        %1019 = vmatprep.subr.bf16.mxu0 0
        %1020 = vmatpush2.bf16.xpose.msra.mxu0 0
        %1021 = vmatprep.subr.bf16.mxu0 0
        %1022 = vmatpush2.bf16.xpose.msra.mxu0 0
        %1023 = vmatprep.subr.bf16.mxu0 0
        %1024 = vmatpush2.bf16.xpose.msra.mxu0 0
        %1025 = vmatprep.subr.bf16.mxu0 0
        %1026 = vmatpush2.bf16.xpose.msra.mxu0 0
        %1027 = vmatprep.mubr.bf16.mxu0 0
        %1028 = vmatmul.mubr.bf16.gmra.mxu0 %v990
        %v1029 = vpop.f32.mrf.mxu0
        %v1030 = vadd.f32 %v868, %v1029
        %v1031 = vpop.f32.mrf.mxu0
        %v1032 = vpop.f32.mrf.mxu0
        %v1033 = vpop.f32.mrf.mxu0
        %1034 = vdwg.mxu0
        %v1035 = vsel %vm877, %v1030, -inf
        %1036 = vmax.xlane.f32.xlu0 %v1035
        %v1037 = vpop.xlane.xlu0 %1036
        %v1038 = vsub.f32 %v1030, %v1037
        %v1039 = vmul.f32 %v1038, 1.442695
        %v1040 = vpow.pop %v1039
        %v1041 = vsel %vm877, %v1040, 0.0
        %1042 = vadd.xlane.f32.xlu0 %v1041
        %v1043 = vpop.xlane.xlu0 %1042
        %v1044 = vpack.c.bf16 %v1040, %v1040
        %1045 = vrot.lane.b32.xlu0 %v748, 48
        %v1046 = vpop.permute.xlu0 %1045
        %v1049 = vsel %vm877, %v1044, 0
        %1051 = vmatprep.subr.bf16.mxu0 0
        %1052 = vmatpush1.bf16.msra.mxu0 0
        %1053 = vmatprep.subr.bf16.mxu0 0
        %1054 = vmatpush1.bf16.msra.mxu0 0
        %1055 = vmatprep.subr.bf16.mxu0 0
        %1056 = vmatpush1.bf16.msra.mxu0 0
        %1057 = vmatprep.subr.bf16.mxu0 0
        %1058 = vmatpush1.bf16.msra.mxu0 0
        %1059 = vmatprep.subr.bf16.mxu0 0
        %1060 = vmatpush1.bf16.msra.mxu0 0
        %1061 = vmatprep.subr.bf16.mxu0 0
        %1062 = vmatpush1.bf16.msra.mxu0 0
        %1063 = vmatprep.subr.bf16.mxu0 0
        %1064 = vmatpush1.bf16.msra.mxu0 0
        %1065 = vmatprep.subr.bf16.mxu0 0
        %1066 = vmatpush1.bf16.msra.mxu0 %v1046
        %1067 = vmatprep.subr.bf16.mxu0 0
        %1068 = vmatpush2.bf16.msra.mxu0 0
        %1069 = vmatprep.subr.bf16.mxu0 0
        %1070 = vmatpush2.bf16.msra.mxu0 0
        %1071 = vmatprep.subr.bf16.mxu0 0
        %1072 = vmatpush2.bf16.msra.mxu0 0
        %1073 = vmatprep.subr.bf16.mxu0 0
        %1074 = vmatpush2.bf16.msra.mxu0 0
        %1075 = vmatprep.subr.bf16.mxu0 0
        %1076 = vmatpush2.bf16.msra.mxu0 0
        %1077 = vmatprep.subr.bf16.mxu0 0
        %1078 = vmatpush2.bf16.msra.mxu0 0
        %1079 = vmatprep.subr.bf16.mxu0 0
        %1080 = vmatpush2.bf16.msra.mxu0 0
        %1081 = vmatprep.subr.bf16.mxu0 0
        %1082 = vmatpush2.bf16.msra.mxu0 0
        %1083 = vmatprep.mubr.bf16.mxu0 0
        %1084 = vmatmul.mubr.bf16.gmra.mxu0 %v1049
        %v1085 = vpop.f32.mrf.mxu0
        %v1086 = vadd.f32 0.0, %v1085
        %v1087 = vpop.f32.mrf.mxu0
        %v1088 = vpop.f32.mrf.mxu0
        %v1089 = vpop.f32.mrf.mxu0
        %1090 = vdwg.mxu0
        %v1091 = vrcp.pop %v1043
        %v1092 = vmul.f32 %v1086, %v1091
        %v1093 = vpack.c.bf16 %v1092, %v1092
        %v1096 = vunpack.c.l.b16 %v871
        %v1097 = vunpack.c.l.b16 %v872
        %v1098 = vpack.c.b16 %v1097, %v1096
        %v1101 = vsel %vm877, %v1093, 0
        %1103 = vmatprep.subr.bf16.mxu0 0
        %1104 = vmatpush1.bf16.msra.mxu0 0
        %1105 = vmatprep.subr.bf16.mxu0 0
        %1106 = vmatpush1.bf16.msra.mxu0 0
        %1107 = vmatprep.subr.bf16.mxu0 0
        %1108 = vmatpush1.bf16.msra.mxu0 0
        %1109 = vmatprep.subr.bf16.mxu0 0
        %1110 = vmatpush1.bf16.msra.mxu0 0
        %1111 = vmatprep.subr.bf16.mxu0 0
        %1112 = vmatpush1.bf16.msra.mxu0 0
        %1113 = vmatprep.subr.bf16.mxu0 0
        %1114 = vmatpush1.bf16.msra.mxu0 0
        %1115 = vmatprep.subr.bf16.mxu0 0
        %1116 = vmatpush1.bf16.msra.mxu0 0
        %1117 = vmatprep.subr.bf16.mxu0 0
        %1118 = vmatpush1.bf16.msra.mxu0 %v1098
        %1119 = vmatprep.subr.bf16.mxu0 0
        %1120 = vmatpush2.bf16.msra.mxu0 0
        %1121 = vmatprep.subr.bf16.mxu0 0
        %1122 = vmatpush2.bf16.msra.mxu0 0
        %1123 = vmatprep.subr.bf16.mxu0 0
        %1124 = vmatpush2.bf16.msra.mxu0 0
        %1125 = vmatprep.subr.bf16.mxu0 0
        %1126 = vmatpush2.bf16.msra.mxu0 0
        %1127 = vmatprep.subr.bf16.mxu0 0
        %1128 = vmatpush2.bf16.msra.mxu0 0
        %1129 = vmatprep.subr.bf16.mxu0 0
        %1130 = vmatpush2.bf16.msra.mxu0 0
        %1131 = vmatprep.subr.bf16.mxu0 0
        %1132 = vmatpush2.bf16.msra.mxu0 0
        %1133 = vmatprep.subr.bf16.mxu0 0
        %1134 = vmatpush2.bf16.msra.mxu0 0
        %1135 = vmatprep.mubr.bf16.mxu0 0
        %1136 = vmatmul.mubr.bf16.gmra.mxu0 %v1101
        %v1137 = vpop.f32.mrf.mxu0
        %v1138 = vadd.f32 0.0, %v1137
        %v1139 = vpop.f32.mrf.mxu0
        %v1140 = vpop.f32.mrf.mxu0
        %v1141 = vpop.f32.mrf.mxu0
        %1142 = vdwg.mxu0
        %v1145 = vunpack.c.l.b16 %v869
        %v1146 = vunpack.c.l.b16 %v870
        %v1147 = vpack.c.b16 %v1146, %v1145
        %v1150 = vsel %vm877, %v983, 0
        %1152 = vmatprep.subr.bf16.mxu0 0
        %1153 = vmatpush1.bf16.msra.mxu0 0
        %1154 = vmatprep.subr.bf16.mxu0 0
        %1155 = vmatpush1.bf16.msra.mxu0 0
        %1156 = vmatprep.subr.bf16.mxu0 0
        %1157 = vmatpush1.bf16.msra.mxu0 0
        %1158 = vmatprep.subr.bf16.mxu0 0
        %1159 = vmatpush1.bf16.msra.mxu0 0
        %1160 = vmatprep.subr.bf16.mxu0 0
        %1161 = vmatpush1.bf16.msra.mxu0 0
        %1162 = vmatprep.subr.bf16.mxu0 0
        %1163 = vmatpush1.bf16.msra.mxu0 0
        %1164 = vmatprep.subr.bf16.mxu0 0
        %1165 = vmatpush1.bf16.msra.mxu0 0
        %1166 = vmatprep.subr.bf16.mxu0 0
        %1167 = vmatpush1.bf16.msra.mxu0 %v1147
        %1168 = vmatprep.subr.bf16.mxu0 0
        %1169 = vmatpush2.bf16.msra.mxu0 0
        %1170 = vmatprep.subr.bf16.mxu0 0
        %1171 = vmatpush2.bf16.msra.mxu0 0
        %1172 = vmatprep.subr.bf16.mxu0 0
        %1173 = vmatpush2.bf16.msra.mxu0 0
        %1174 = vmatprep.subr.bf16.mxu0 0
        %1175 = vmatpush2.bf16.msra.mxu0 0
        %1176 = vmatprep.subr.bf16.mxu0 0
        %1177 = vmatpush2.bf16.msra.mxu0 0
        %1178 = vmatprep.subr.bf16.mxu0 0
        %1179 = vmatpush2.bf16.msra.mxu0 0
        %1180 = vmatprep.subr.bf16.mxu0 0
        %1181 = vmatpush2.bf16.msra.mxu0 0
        %1182 = vmatprep.subr.bf16.mxu0 0
        %1183 = vmatpush2.bf16.msra.mxu0 0
        %1184 = vmatprep.mubr.bf16.mxu0 0
        %1185 = vmatmul.mubr.bf16.gmra.mxu0 %v1150
        %v1186 = vpop.f32.mrf.mxu0
        %v1187 = vadd.f32 %v1138, %v1186
        %v1188 = vpop.f32.mrf.mxu0
        %v1189 = vpop.f32.mrf.mxu0
        %v1190 = vpop.f32.mrf.mxu0
        %1191 = vdwg.mxu0
        %1192 = vrot.lane.b32.xlu0 %v852, 96
        %v1193 = vpop.permute.xlu0 %1192
        %1194 = vrot.lane.b32.xlu0 %v748, 96
        %v1195 = vpop.permute.xlu0 %1194
        %v1197 = vsel %vm877, %v1193, 0
        %v1200 = vsel %vm877, %v1195, 0
        %1202 = vmatprep.subr.bf16.mxu0 0
        %1203 = vmatpush1.bf16.xpose.msra.mxu0 0
        %1204 = vmatprep.subr.bf16.mxu0 0
        %1205 = vmatpush1.bf16.xpose.msra.mxu0 0
        %1206 = vmatprep.subr.bf16.mxu0 0
        %1207 = vmatpush1.bf16.xpose.msra.mxu0 0
        %1208 = vmatprep.subr.bf16.mxu0 0
        %1209 = vmatpush1.bf16.xpose.msra.mxu0 0
        %1210 = vmatprep.subr.bf16.mxu0 0
        %1211 = vmatpush1.bf16.xpose.msra.mxu0 0
        %1212 = vmatprep.subr.bf16.mxu0 0
        %1213 = vmatpush1.bf16.xpose.msra.mxu0 0
        %1214 = vmatprep.subr.bf16.mxu0 0
        %1215 = vmatpush1.bf16.xpose.msra.mxu0 0
        %1216 = vmatprep.subr.bf16.mxu0 0
        %1217 = vmatpush1.bf16.xpose.msra.mxu0 %v1200
        %1218 = vmatprep.subr.bf16.mxu0 0
        %1219 = vmatpush2.bf16.xpose.msra.mxu0 0
        %1220 = vmatprep.subr.bf16.mxu0 0
        %1221 = vmatpush2.bf16.xpose.msra.mxu0 0
        %1222 = vmatprep.subr.bf16.mxu0 0
        %1223 = vmatpush2.bf16.xpose.msra.mxu0 0
        %1224 = vmatprep.subr.bf16.mxu0 0
        %1225 = vmatpush2.bf16.xpose.msra.mxu0 0
        %1226 = vmatprep.subr.bf16.mxu0 0
        %1227 = vmatpush2.bf16.xpose.msra.mxu0 0
        %1228 = vmatprep.subr.bf16.mxu0 0
        %1229 = vmatpush2.bf16.xpose.msra.mxu0 0
        %1230 = vmatprep.subr.bf16.mxu0 0
        %1231 = vmatpush2.bf16.xpose.msra.mxu0 0
        %1232 = vmatprep.subr.bf16.mxu0 0
        %1233 = vmatpush2.bf16.xpose.msra.mxu0 0
        %1234 = vmatprep.mubr.bf16.mxu0 0
        %1235 = vmatmul.mubr.bf16.gmra.mxu0 %v1197
        %v1236 = vpop.f32.mrf.mxu0
        %v1237 = vadd.f32 %v868, %v1236
        %v1238 = vpop.f32.mrf.mxu0
        %v1239 = vpop.f32.mrf.mxu0
        %v1240 = vpop.f32.mrf.mxu0
        %1241 = vdwg.mxu0
        %v1242 = vsel %vm877, %v1237, -inf
        %1243 = vmax.xlane.f32.xlu0 %v1242
        %v1244 = vpop.xlane.xlu0 %1243
        %v1245 = vsub.f32 %v1237, %v1244
        %v1246 = vmul.f32 %v1245, 1.442695
        %v1247 = vpow.pop %v1246
        %v1248 = vsel %vm877, %v1247, 0.0
        %1249 = vadd.xlane.f32.xlu0 %v1248
        %v1250 = vpop.xlane.xlu0 %1249
        %v1251 = vpack.c.bf16 %v1247, %v1247
        %1252 = vrot.lane.b32.xlu0 %v748, 32
        %v1253 = vpop.permute.xlu0 %1252
        %v1256 = vsel %vm877, %v1251, 0
        %1258 = vmatprep.subr.bf16.mxu0 0
        %1259 = vmatpush1.bf16.msra.mxu0 0
        %1260 = vmatprep.subr.bf16.mxu0 0
        %1261 = vmatpush1.bf16.msra.mxu0 0
        %1262 = vmatprep.subr.bf16.mxu0 0
        %1263 = vmatpush1.bf16.msra.mxu0 0
        %1264 = vmatprep.subr.bf16.mxu0 0
        %1265 = vmatpush1.bf16.msra.mxu0 0
        %1266 = vmatprep.subr.bf16.mxu0 0
        %1267 = vmatpush1.bf16.msra.mxu0 0
        %1268 = vmatprep.subr.bf16.mxu0 0
        %1269 = vmatpush1.bf16.msra.mxu0 0
        %1270 = vmatprep.subr.bf16.mxu0 0
        %1271 = vmatpush1.bf16.msra.mxu0 0
        %1272 = vmatprep.subr.bf16.mxu0 0
        %1273 = vmatpush1.bf16.msra.mxu0 %v1253
        %1274 = vmatprep.subr.bf16.mxu0 0
        %1275 = vmatpush2.bf16.msra.mxu0 0
        %1276 = vmatprep.subr.bf16.mxu0 0
        %1277 = vmatpush2.bf16.msra.mxu0 0
        %1278 = vmatprep.subr.bf16.mxu0 0
        %1279 = vmatpush2.bf16.msra.mxu0 0
        %1280 = vmatprep.subr.bf16.mxu0 0
        %1281 = vmatpush2.bf16.msra.mxu0 0
        %1282 = vmatprep.subr.bf16.mxu0 0
        %1283 = vmatpush2.bf16.msra.mxu0 0
        %1284 = vmatprep.subr.bf16.mxu0 0
        %1285 = vmatpush2.bf16.msra.mxu0 0
        %1286 = vmatprep.subr.bf16.mxu0 0
        %1287 = vmatpush2.bf16.msra.mxu0 0
        %1288 = vmatprep.subr.bf16.mxu0 0
        %1289 = vmatpush2.bf16.msra.mxu0 0
        %1290 = vmatprep.mubr.bf16.mxu0 0
        %1291 = vmatmul.mubr.bf16.gmra.mxu0 %v1256
        %v1292 = vpop.f32.mrf.mxu0
        %v1293 = vadd.f32 0.0, %v1292
        %v1294 = vpop.f32.mrf.mxu0
        %v1295 = vpop.f32.mrf.mxu0
        %v1296 = vpop.f32.mrf.mxu0
        %1297 = vdwg.mxu0
        %v1298 = vrcp.pop %v1250
        %v1299 = vmul.f32 %v1293, %v1298
        %v1300 = vpack.c.bf16 %v1299, %v1299
        %v1303 = vunpack.c.l.b16 %v873
        %v1304 = vunpack.c.l.b16 %v874
        %v1305 = vpack.c.b16 %v1304, %v1303
        %v1308 = vsel %vm877, %v1300, 0
        %1310 = vmatprep.subr.bf16.mxu0 0
        %1311 = vmatpush1.bf16.msra.mxu0 0
        %1312 = vmatprep.subr.bf16.mxu0 0
        %1313 = vmatpush1.bf16.msra.mxu0 0
        %1314 = vmatprep.subr.bf16.mxu0 0
        %1315 = vmatpush1.bf16.msra.mxu0 0
        %1316 = vmatprep.subr.bf16.mxu0 0
        %1317 = vmatpush1.bf16.msra.mxu0 0
        %1318 = vmatprep.subr.bf16.mxu0 0
        %1319 = vmatpush1.bf16.msra.mxu0 0
        %1320 = vmatprep.subr.bf16.mxu0 0
        %1321 = vmatpush1.bf16.msra.mxu0 0
        %1322 = vmatprep.subr.bf16.mxu0 0
        %1323 = vmatpush1.bf16.msra.mxu0 0
        %1324 = vmatprep.subr.bf16.mxu0 0
        %1325 = vmatpush1.bf16.msra.mxu0 %v1305
        %1326 = vmatprep.subr.bf16.mxu0 0
        %1327 = vmatpush2.bf16.msra.mxu0 0
        %1328 = vmatprep.subr.bf16.mxu0 0
        %1329 = vmatpush2.bf16.msra.mxu0 0
        %1330 = vmatprep.subr.bf16.mxu0 0
        %1331 = vmatpush2.bf16.msra.mxu0 0
        %1332 = vmatprep.subr.bf16.mxu0 0
        %1333 = vmatpush2.bf16.msra.mxu0 0
        %1334 = vmatprep.subr.bf16.mxu0 0
        %1335 = vmatpush2.bf16.msra.mxu0 0
        %1336 = vmatprep.subr.bf16.mxu0 0
        %1337 = vmatpush2.bf16.msra.mxu0 0
        %1338 = vmatprep.subr.bf16.mxu0 0
        %1339 = vmatpush2.bf16.msra.mxu0 0
        %1340 = vmatprep.subr.bf16.mxu0 0
        %1341 = vmatpush2.bf16.msra.mxu0 0
        %1342 = vmatprep.mubr.bf16.mxu0 0
        %1343 = vmatmul.mubr.bf16.gmra.mxu0 %v1308
        %v1344 = vpop.f32.mrf.mxu0
        %v1345 = vadd.f32 0.0, %v1344
        %v1346 = vpop.f32.mrf.mxu0
        %v1347 = vpop.f32.mrf.mxu0
        %v1348 = vpop.f32.mrf.mxu0
        %1349 = vdwg.mxu0
        %v1350 = vadd.f32 %v1187, %v1345
        %1351 = vrot.lane.b32.xlu0 %v852, 80
        %v1352 = vpop.permute.xlu0 %1351
        %1353 = vrot.lane.b32.xlu0 %v748, 80
        %v1354 = vpop.permute.xlu0 %1353
        %v1356 = vsel %vm877, %v1352, 0
        %v1359 = vsel %vm877, %v1354, 0
        %1361 = vmatprep.subr.bf16.mxu0 0
        %1362 = vmatpush1.bf16.xpose.msra.mxu0 0
        %1363 = vmatprep.subr.bf16.mxu0 0
        %1364 = vmatpush1.bf16.xpose.msra.mxu0 0
        %1365 = vmatprep.subr.bf16.mxu0 0
        %1366 = vmatpush1.bf16.xpose.msra.mxu0 0
        %1367 = vmatprep.subr.bf16.mxu0 0
        %1368 = vmatpush1.bf16.xpose.msra.mxu0 0
        %1369 = vmatprep.subr.bf16.mxu0 0
        %1370 = vmatpush1.bf16.xpose.msra.mxu0 0
        %1371 = vmatprep.subr.bf16.mxu0 0
        %1372 = vmatpush1.bf16.xpose.msra.mxu0 0
        %1373 = vmatprep.subr.bf16.mxu0 0
        %1374 = vmatpush1.bf16.xpose.msra.mxu0 0
        %1375 = vmatprep.subr.bf16.mxu0 0
        %1376 = vmatpush1.bf16.xpose.msra.mxu0 %v1359
        %1377 = vmatprep.subr.bf16.mxu0 0
        %1378 = vmatpush2.bf16.xpose.msra.mxu0 0
        %1379 = vmatprep.subr.bf16.mxu0 0
        %1380 = vmatpush2.bf16.xpose.msra.mxu0 0
        %1381 = vmatprep.subr.bf16.mxu0 0
        %1382 = vmatpush2.bf16.xpose.msra.mxu0 0
        %1383 = vmatprep.subr.bf16.mxu0 0
        %1384 = vmatpush2.bf16.xpose.msra.mxu0 0
        %1385 = vmatprep.subr.bf16.mxu0 0
        %1386 = vmatpush2.bf16.xpose.msra.mxu0 0
        %1387 = vmatprep.subr.bf16.mxu0 0
        %1388 = vmatpush2.bf16.xpose.msra.mxu0 0
        %1389 = vmatprep.subr.bf16.mxu0 0
        %1390 = vmatpush2.bf16.xpose.msra.mxu0 0
        %1391 = vmatprep.subr.bf16.mxu0 0
        %1392 = vmatpush2.bf16.xpose.msra.mxu0 0
        %1393 = vmatprep.mubr.bf16.mxu0 0
        %1394 = vmatmul.mubr.bf16.gmra.mxu0 %v1356
        %v1395 = vpop.f32.mrf.mxu0
        %v1396 = vadd.f32 %v868, %v1395
        %v1397 = vpop.f32.mrf.mxu0
        %v1398 = vpop.f32.mrf.mxu0
        %v1399 = vpop.f32.mrf.mxu0
        %1400 = vdwg.mxu0
        %v1401 = vsel %vm877, %v1396, -inf
        %1402 = vmax.xlane.f32.xlu0 %v1401
        %v1403 = vpop.xlane.xlu0 %1402
        %v1404 = vsub.f32 %v1396, %v1403
        %v1405 = vmul.f32 %v1404, 1.442695
        %v1406 = vpow.pop %v1405
        %v1407 = vsel %vm877, %v1406, 0.0
        %1408 = vadd.xlane.f32.xlu0 %v1407
        %v1409 = vpop.xlane.xlu0 %1408
        %v1410 = vpack.c.bf16 %v1406, %v1406
        %1411 = vrot.lane.b32.xlu0 %v748, 16
        %v1412 = vpop.permute.xlu0 %1411
        %v1415 = vsel %vm877, %v1410, 0
        %1417 = vmatprep.subr.bf16.mxu0 0
        %1418 = vmatpush1.bf16.msra.mxu0 0
        %1419 = vmatprep.subr.bf16.mxu0 0
        %1420 = vmatpush1.bf16.msra.mxu0 0
        %1421 = vmatprep.subr.bf16.mxu0 0
        %1422 = vmatpush1.bf16.msra.mxu0 0
        %1423 = vmatprep.subr.bf16.mxu0 0
        %1424 = vmatpush1.bf16.msra.mxu0 0
        %1425 = vmatprep.subr.bf16.mxu0 0
        %1426 = vmatpush1.bf16.msra.mxu0 0
        %1427 = vmatprep.subr.bf16.mxu0 0
        %1428 = vmatpush1.bf16.msra.mxu0 0
        %1429 = vmatprep.subr.bf16.mxu0 0
        %1430 = vmatpush1.bf16.msra.mxu0 0
        %1431 = vmatprep.subr.bf16.mxu0 0
        %1432 = vmatpush1.bf16.msra.mxu0 %v1412
        %1433 = vmatprep.subr.bf16.mxu0 0
        %1434 = vmatpush2.bf16.msra.mxu0 0
        %1435 = vmatprep.subr.bf16.mxu0 0
        %1436 = vmatpush2.bf16.msra.mxu0 0
        %1437 = vmatprep.subr.bf16.mxu0 0
        %1438 = vmatpush2.bf16.msra.mxu0 0
        %1439 = vmatprep.subr.bf16.mxu0 0
        %1440 = vmatpush2.bf16.msra.mxu0 0
        %1441 = vmatprep.subr.bf16.mxu0 0
        %1442 = vmatpush2.bf16.msra.mxu0 0
        %1443 = vmatprep.subr.bf16.mxu0 0
        %1444 = vmatpush2.bf16.msra.mxu0 0
        %1445 = vmatprep.subr.bf16.mxu0 0
        %1446 = vmatpush2.bf16.msra.mxu0 0
        %1447 = vmatprep.subr.bf16.mxu0 0
        %1448 = vmatpush2.bf16.msra.mxu0 0
        %1449 = vmatprep.mubr.bf16.mxu0 0
        %1450 = vmatmul.mubr.bf16.gmra.mxu0 %v1415
        %v1451 = vpop.f32.mrf.mxu0
        %v1452 = vadd.f32 0.0, %v1451
        %v1453 = vpop.f32.mrf.mxu0
        %v1454 = vpop.f32.mrf.mxu0
        %v1455 = vpop.f32.mrf.mxu0
        %1456 = vdwg.mxu0
        %v1457 = vrcp.pop %v1409
        %v1458 = vmul.f32 %v1452, %v1457
        %v1459 = vpack.c.bf16 %v1458, %v1458
        %v1462 = vunpack.c.l.b16 %v875
        %v1463 = vunpack.c.l.b16 %v876
        %v1464 = vpack.c.b16 %v1463, %v1462
        %v1467 = vsel %vm877, %v1459, 0
        %1469 = vmatprep.subr.bf16.mxu0 0
        %1470 = vmatpush1.bf16.msra.mxu0 0
        %1471 = vmatprep.subr.bf16.mxu0 0
        %1472 = vmatpush1.bf16.msra.mxu0 0
        %1473 = vmatprep.subr.bf16.mxu0 0
        %1474 = vmatpush1.bf16.msra.mxu0 0
        %1475 = vmatprep.subr.bf16.mxu0 0
        %1476 = vmatpush1.bf16.msra.mxu0 0
        %1477 = vmatprep.subr.bf16.mxu0 0
        %1478 = vmatpush1.bf16.msra.mxu0 0
        %1479 = vmatprep.subr.bf16.mxu0 0
        %1480 = vmatpush1.bf16.msra.mxu0 0
        %1481 = vmatprep.subr.bf16.mxu0 0
        %1482 = vmatpush1.bf16.msra.mxu0 0
        %1483 = vmatprep.subr.bf16.mxu0 0
        %1484 = vmatpush1.bf16.msra.mxu0 %v1464
        %1485 = vmatprep.subr.bf16.mxu0 0
        %1486 = vmatpush2.bf16.msra.mxu0 0
        %1487 = vmatprep.subr.bf16.mxu0 0
        %1488 = vmatpush2.bf16.msra.mxu0 0
        %1489 = vmatprep.subr.bf16.mxu0 0
        %1490 = vmatpush2.bf16.msra.mxu0 0
        %1491 = vmatprep.subr.bf16.mxu0 0
        %1492 = vmatpush2.bf16.msra.mxu0 0
        %1493 = vmatprep.subr.bf16.mxu0 0
        %1494 = vmatpush2.bf16.msra.mxu0 0
        %1495 = vmatprep.subr.bf16.mxu0 0
        %1496 = vmatpush2.bf16.msra.mxu0 0
        %1497 = vmatprep.subr.bf16.mxu0 0
        %1498 = vmatpush2.bf16.msra.mxu0 0
        %1499 = vmatprep.subr.bf16.mxu0 0
        %1500 = vmatpush2.bf16.msra.mxu0 0
        %1501 = vmatprep.mubr.bf16.mxu0 0
        %1502 = vmatmul.mubr.bf16.gmra.mxu0 %v1467
        %v1503 = vpop.f32.mrf.mxu0
        %v1504 = vadd.f32 0.0, %v1503
        %v1505 = vpop.f32.mrf.mxu0
        %v1506 = vpop.f32.mrf.mxu0
        %v1507 = vpop.f32.mrf.mxu0
        %1508 = vdwg.mxu0
        %v1509 = vadd.f32 %v1350, %v1504
        %v1510 = vadd.f32 %v753, %v1509
        %v1511 = vld [vmem:[%s10] sm:$0x1]
        %v1513 = vlaneseq
        %v1514 = vshrl.u32 %v1513, 7
        %v1515 = vsub.s32 0, %v1514
        %v1516 = vrot.slane %v1511, %v1515
        %v1518 = vadd.f32 %v1510, %v1516
        %v1519 = vld [vmem:[%s11] sm:$0x1]
        %v1520 = vld [vmem:[%s12] sm:$0x1]
        %v1521 = vsel %vm620, %v1518, 0.0
        %1522 = vadd.xlane.f32.xlu0 %v1521
        %v1523 = vpop.xlane.xlu0 %1522
        %v1524 = vmul.f32 %v1523, %v627
        %v1525 = vsub.f32 %v1518, %v1524
        %v1526 = vmul.f32 %v1525, %v1525
        %v1527 = vsel %vm620, %v1526, 0.0
        %1528 = vadd.xlane.f32.xlu0 %v1527
        %v1529 = vpop.xlane.xlu0 %1528
        %v1530 = vmul.f32 %v1529, %v627
        %v1531 = vadd.f32 %v1530, 1e-05
        %v1532 = vrsqrt.pop %v1531
        %v1533 = vmul.f32 %v1525, %v1532
        %v1535 = vlaneseq
        %v1536 = vshrl.u32 %v1535, 7
        %v1537 = vsub.s32 0, %v1536
        %v1538 = vrot.slane %v1519, %v1537
        %v1540 = vmul.f32 %v1533, %v1538
        %v1542 = vlaneseq
        %v1543 = vshrl.u32 %v1542, 7
        %v1544 = vsub.s32 0, %v1543
        %v1545 = vrot.slane %v1520, %v1544
        %v1547 = vadd.f32 %v1540, %v1545
        %v1548 = vpack.c.bf16 %v1547, %v1547
        %v1549 = vld [vmem:[%s13] sm:$0xff]
        %v1550 = vld [vmem:[%s13 + $0x8] sm:$0xff]
        %v1551 = vld [vmem:[%s13 + $0x10] sm:$0xff]
        %v1552 = vld [vmem:[%s13 + $0x18] sm:$0xff]
        %v1553 = vld [vmem:[%s13 + $0x20] sm:$0xff]
        %v1554 = vld [vmem:[%s13 + $0x28] sm:$0xff]
        %v1555 = vld [vmem:[%s13 + $0x30] sm:$0xff]
        %v1556 = vld [vmem:[%s13 + $0x38] sm:$0xff]
        %v1557 = vld [vmem:[%s14] sm:$0x3]
        %v1559 = vlaneseq
        %v1560 = vshrl.u32 %v1559, 7
        %v1561 = vsub.s32 0, %v1560
        %v1562 = vrot.slane %v1557, %v1561
        %v1563 = vlaneseq
        %v1564 = vshrl.u32 %v1563, 7
        %v1565 = vsub.s32 1, %v1564
        %v1566 = vrot.slane %v1557, %v1565
        %v1577 = vunpack.c.l.b16 %v1549
        %v1578 = vunpack.c.h.b16 %v1549
        %v1579 = vunpack.c.l.b16 %v1550
        %v1580 = vunpack.c.h.b16 %v1550
        %v1581 = vunpack.c.l.b16 %v1551
        %v1582 = vunpack.c.h.b16 %v1551
        %v1583 = vunpack.c.l.b16 %v1552
        %v1584 = vunpack.c.h.b16 %v1552
        %v1585 = vunpack.c.l.b16 %v1553
        %v1586 = vunpack.c.h.b16 %v1553
        %v1587 = vunpack.c.l.b16 %v1554
        %v1588 = vunpack.c.h.b16 %v1554
        %v1589 = vunpack.c.l.b16 %v1555
        %v1590 = vunpack.c.h.b16 %v1555
        %v1591 = vunpack.c.l.b16 %v1556
        %v1592 = vunpack.c.h.b16 %v1556
        %v1593 = vpack.c.b16 %v1579, %v1577
        %v1594 = vpack.c.b16 %v1580, %v1578
        %v1595 = vpack.c.b16 %v1583, %v1581
        %v1596 = vpack.c.b16 %v1584, %v1582
        %v1597 = vpack.c.b16 %v1587, %v1585
        %v1598 = vpack.c.b16 %v1588, %v1586
        %v1599 = vpack.c.b16 %v1591, %v1589
        %v1600 = vpack.c.b16 %v1592, %v1590
        %v1610 = vsel %vm620, %v1548, 0
        %1612 = vmatprep.subr.bf16.mxu0 0
        %1613 = vmatpush1.bf16.msra.mxu0 0
        %1614 = vmatprep.subr.bf16.mxu0 0
        %1615 = vmatpush1.bf16.msra.mxu0 0
        %1616 = vmatprep.subr.bf16.mxu0 0
        %1617 = vmatpush1.bf16.msra.mxu0 0
        %1618 = vmatprep.subr.bf16.mxu0 0
        %1619 = vmatpush1.bf16.msra.mxu0 0
        %1620 = vmatprep.subr.bf16.mxu0 %v1600
        %1621 = vmatpush1.bf16.msra.mxu0 %v1599
        %1622 = vmatprep.subr.bf16.mxu0 %v1598
        %1623 = vmatpush1.bf16.msra.mxu0 %v1597
        %1624 = vmatprep.subr.bf16.mxu0 %v1596
        %1625 = vmatpush1.bf16.msra.mxu0 %v1595
        %1626 = vmatprep.subr.bf16.mxu0 %v1594
        %1627 = vmatpush1.bf16.msra.mxu0 %v1593
        %1628 = vmatprep.subr.bf16.mxu0 0
        %1629 = vmatpush2.bf16.msra.mxu0 0
        %1630 = vmatprep.subr.bf16.mxu0 0
        %1631 = vmatpush2.bf16.msra.mxu0 0
        %1632 = vmatprep.subr.bf16.mxu0 0
        %1633 = vmatpush2.bf16.msra.mxu0 0
        %1634 = vmatprep.subr.bf16.mxu0 0
        %1635 = vmatpush2.bf16.msra.mxu0 0
        %1636 = vmatprep.subr.bf16.mxu0 0
        %1637 = vmatpush2.bf16.msra.mxu0 0
        %1638 = vmatprep.subr.bf16.mxu0 0
        %1639 = vmatpush2.bf16.msra.mxu0 0
        %1640 = vmatprep.subr.bf16.mxu0 0
        %1641 = vmatpush2.bf16.msra.mxu0 0
        %1642 = vmatprep.subr.bf16.mxu0 0
        %1643 = vmatpush2.bf16.msra.mxu0 0
        %1644 = vmatprep.mubr.bf16.mxu0 0
        %1645 = vmatmul.mubr.bf16.gmra.mxu0 %v1610
        %v1646 = vpop.f32.mrf.mxu0
        %v1647 = vadd.f32 %v1562, %v1646
        %v1648 = vpop.f32.mrf.mxu0
        %v1649 = vadd.f32 %v1566, %v1648
        %v1650 = vpop.f32.mrf.mxu0
        %v1651 = vpop.f32.mrf.mxu0
        %1652 = vdwg.mxu0
        %v1653 = vmul.f32 %v1647, 0.5
        %v1654 = vmul.f32 %v1649, 0.5
        %v1655 = vmul.f32 %v1647, 0.044715
        %v1656 = vmul.f32 %v1649, 0.044715
        %v1657 = vmul.f32 %v1655, %v1647
        %v1658 = vmul.f32 %v1656, %v1649
        %v1659 = vmul.f32 %v1657, %v1647
        %v1660 = vmul.f32 %v1658, %v1649
        %v1661 = vadd.f32 %v1647, %v1659
        %v1662 = vadd.f32 %v1649, %v1660
        %v1663 = vmul.f32 %v1661, 0.7978846
        %v1664 = vmul.f32 %v1662, 0.7978846
        %v1665 = vtanh.pop %v1663
        %v1666 = vtanh.pop %v1664
        %v1667 = vadd.f32 %v1665, 1.0
        %v1668 = vadd.f32 %v1666, 1.0
        %v1669 = vmul.f32 %v1653, %v1667
        %v1670 = vmul.f32 %v1654, %v1668
        %v1671 = vpack.c.bf16 %v1669, %v1669
        %v1672 = vpack.c.bf16 %v1670, %v1670
        %v1673 = vld [vmem:[%s15] sm:$0xf]
        %v1674 = vld [vmem:[%s15 + $0x4] sm:$0xf]
        %v1675 = vld [vmem:[%s15 + $0x8] sm:$0xf]
        %v1676 = vld [vmem:[%s15 + $0xc] sm:$0xf]
        %v1677 = vld [vmem:[%s15 + $0x10] sm:$0xf]
        %v1678 = vld [vmem:[%s15 + $0x14] sm:$0xf]
        %v1679 = vld [vmem:[%s15 + $0x18] sm:$0xf]
        %v1680 = vld [vmem:[%s15 + $0x1c] sm:$0xf]
        %v1681 = vld [vmem:[%s15 + $0x20] sm:$0xf]
        %v1682 = vld [vmem:[%s15 + $0x24] sm:$0xf]
        %v1683 = vld [vmem:[%s15 + $0x28] sm:$0xf]
        %v1684 = vld [vmem:[%s15 + $0x2c] sm:$0xf]
        %v1685 = vld [vmem:[%s15 + $0x30] sm:$0xf]
        %v1686 = vld [vmem:[%s15 + $0x34] sm:$0xf]
        %v1687 = vld [vmem:[%s15 + $0x38] sm:$0xf]
        %v1688 = vld [vmem:[%s15 + $0x3c] sm:$0xf]
        %v1689 = vld [vmem:[%s15 + $0x40] sm:$0xf]
        %v1690 = vld [vmem:[%s15 + $0x44] sm:$0xf]
        %v1691 = vld [vmem:[%s15 + $0x48] sm:$0xf]
        %v1692 = vld [vmem:[%s15 + $0x4c] sm:$0xf]
        %v1693 = vld [vmem:[%s15 + $0x50] sm:$0xf]
        %v1694 = vld [vmem:[%s15 + $0x54] sm:$0xf]
        %v1695 = vld [vmem:[%s15 + $0x58] sm:$0xf]
        %v1696 = vld [vmem:[%s15 + $0x5c] sm:$0xf]
        %v1697 = vld [vmem:[%s15 + $0x60] sm:$0xf]
        %v1698 = vld [vmem:[%s15 + $0x64] sm:$0xf]
        %v1699 = vld [vmem:[%s15 + $0x68] sm:$0xf]
        %v1700 = vld [vmem:[%s15 + $0x6c] sm:$0xf]
        %v1701 = vld [vmem:[%s15 + $0x70] sm:$0xf]
        %v1702 = vld [vmem:[%s15 + $0x74] sm:$0xf]
        %v1703 = vld [vmem:[%s15 + $0x78] sm:$0xf]
        %v1704 = vld [vmem:[%s15 + $0x7c] sm:$0xf]
        %v1705 = vld [vmem:[%s16] sm:$0x1]
        %v1707 = vlaneseq
        %v1708 = vshrl.u32 %v1707, 7
        %v1709 = vsub.s32 0, %v1708
        %v1710 = vrot.slane %v1705, %v1709
        %v1744 = vunpack.c.l.b16 %v1673
        %v1745 = vunpack.c.l.b16 %v1674
        %v1746 = vunpack.c.l.b16 %v1675
        %v1747 = vunpack.c.l.b16 %v1676
        %v1748 = vunpack.c.l.b16 %v1677
        %v1749 = vunpack.c.l.b16 %v1678
        %v1750 = vunpack.c.l.b16 %v1679
        %v1751 = vunpack.c.l.b16 %v1680
        %v1752 = vunpack.c.l.b16 %v1681
        %v1753 = vunpack.c.l.b16 %v1682
        %v1754 = vunpack.c.l.b16 %v1683
        %v1755 = vunpack.c.l.b16 %v1684
        %v1756 = vunpack.c.l.b16 %v1685
        %v1757 = vunpack.c.l.b16 %v1686
        %v1758 = vunpack.c.l.b16 %v1687
        %v1759 = vunpack.c.l.b16 %v1688
        %v1760 = vunpack.c.l.b16 %v1689
        %v1761 = vunpack.c.l.b16 %v1690
        %v1762 = vunpack.c.l.b16 %v1691
        %v1763 = vunpack.c.l.b16 %v1692
        %v1764 = vunpack.c.l.b16 %v1693
        %v1765 = vunpack.c.l.b16 %v1694
        %v1766 = vunpack.c.l.b16 %v1695
        %v1767 = vunpack.c.l.b16 %v1696
        %v1768 = vunpack.c.l.b16 %v1697
        %v1769 = vunpack.c.l.b16 %v1698
        %v1770 = vunpack.c.l.b16 %v1699
        %v1771 = vunpack.c.l.b16 %v1700
        %v1772 = vunpack.c.l.b16 %v1701
        %v1773 = vunpack.c.l.b16 %v1702
        %v1774 = vunpack.c.l.b16 %v1703
        %v1775 = vunpack.c.l.b16 %v1704
        %v1776 = vpack.c.b16 %v1745, %v1744
        %v1777 = vpack.c.b16 %v1747, %v1746
        %v1778 = vpack.c.b16 %v1749, %v1748
        %v1779 = vpack.c.b16 %v1751, %v1750
        %v1780 = vpack.c.b16 %v1753, %v1752
        %v1781 = vpack.c.b16 %v1755, %v1754
        %v1782 = vpack.c.b16 %v1757, %v1756
        %v1783 = vpack.c.b16 %v1759, %v1758
        %v1784 = vpack.c.b16 %v1761, %v1760
        %v1785 = vpack.c.b16 %v1763, %v1762
        %v1786 = vpack.c.b16 %v1765, %v1764
        %v1787 = vpack.c.b16 %v1767, %v1766
        %v1788 = vpack.c.b16 %v1769, %v1768
        %v1789 = vpack.c.b16 %v1771, %v1770
        %v1790 = vpack.c.b16 %v1773, %v1772
        %v1791 = vpack.c.b16 %v1775, %v1774
        %1808 = vmatprep.subr.bf16.mxu0 0
        %1809 = vmatpush1.bf16.msra.mxu0 %v1783
        %1810 = vmatprep.subr.bf16.mxu0 0
        %1811 = vmatpush1.bf16.msra.mxu0 %v1782
        %1812 = vmatprep.subr.bf16.mxu0 0
        %1813 = vmatpush1.bf16.msra.mxu0 %v1781
        %1814 = vmatprep.subr.bf16.mxu0 0
        %1815 = vmatpush1.bf16.msra.mxu0 %v1780
        %1816 = vmatprep.subr.bf16.mxu0 0
        %1817 = vmatpush1.bf16.msra.mxu0 %v1779
        %1818 = vmatprep.subr.bf16.mxu0 0
        %1819 = vmatpush1.bf16.msra.mxu0 %v1778
        %1820 = vmatprep.subr.bf16.mxu0 0
        %1821 = vmatpush1.bf16.msra.mxu0 %v1777
        %1822 = vmatprep.subr.bf16.mxu0 0
        %1823 = vmatpush1.bf16.msra.mxu0 %v1776
        %1824 = vmatprep.subr.bf16.mxu0 0
        %1825 = vmatpush2.bf16.msra.mxu0 %v1791
        %1826 = vmatprep.subr.bf16.mxu0 0
        %1827 = vmatpush2.bf16.msra.mxu0 %v1790
        %1828 = vmatprep.subr.bf16.mxu0 0
        %1829 = vmatpush2.bf16.msra.mxu0 %v1789
        %1830 = vmatprep.subr.bf16.mxu0 0
        %1831 = vmatpush2.bf16.msra.mxu0 %v1788
        %1832 = vmatprep.subr.bf16.mxu0 0
        %1833 = vmatpush2.bf16.msra.mxu0 %v1787
        %1834 = vmatprep.subr.bf16.mxu0 0
        %1835 = vmatpush2.bf16.msra.mxu0 %v1786
        %1836 = vmatprep.subr.bf16.mxu0 0
        %1837 = vmatpush2.bf16.msra.mxu0 %v1785
        %1838 = vmatprep.subr.bf16.mxu0 0
        %1839 = vmatpush2.bf16.msra.mxu0 %v1784
        %1840 = vmatprep.mubr.bf16.mxu0 %v1672
        %1841 = vmatmul.mubr.bf16.gmra.mxu0 %v1671
        %v1842 = vpop.f32.mrf.mxu0
        %v1843 = vadd.f32 %v1710, %v1842
        %v1844 = vpop.f32.mrf.mxu0
        %v1845 = vpop.f32.mrf.mxu0
        %v1846 = vpop.f32.mrf.mxu0
        %1847 = vdwg.mxu0
        %v1848 = vadd.f32 %v1518, %v1843
        %1849 = vst.msk [vmem:[%s604] sm:$0xff] %vm620, %v1848
        %s1850 = sand.u32 %s424, 1
        %s1851 = scalar_lea.sflag [#allocation4], %s1850
        %s1852 = sand.u32 %s424, 1
        %s1853 = smul.addr %s1852, 8
        %s1854 = scalar_lea.vmem [#allocation7], %s1853
        // Predicated region
        $region97: #{tpu_custom_call.1} parent=87 // pred_check
          %p1855 = pneg %p434
        $region98: #{tpu_custom_call.1} parent=87 // pred_check_branch
          %1857 = sbr.rel (%p1855) target = $region100
        $region99: #{tpu_custom_call.1} parent=87 // pred_region
          %s1859 = ssub.s32 128, 128
          %1860 = vsyncadd %s1851, %s1859
          %s1861 = smul.addr %s39, 2
          %s1862 = sadd.s32 %s40, %s1861
          %s1863 = smul.addr %s1862, 128
          %s1864 = scalar_lea.hbm %s17, %s1863
          %s1866 = sshll.u32 %s1854, 4
          %s1867 = int_to_ptr.vmem [resolvable:$true] %s1866
          %1869 = dma.vmem_to_hbm [thread:$0]  %s1867, 128, %s1864, %s1851
        $region100: #{tpu_custom_call.1} parent=87 // pred_fallthru
          _
      $region88: #{tpu_custom_call.1} parent=5 // pred_fallthru
        _
      %p1870 = scmp.le.s32.totalorder 2, %s30
      // Predicated region
      $region101: #{tpu_custom_call.1} parent=5 // pred_check
        %p1871 = pneg %p1870
      $region102: #{tpu_custom_call.1} parent=5 // pred_check_branch
        %1873 = sbr.rel (%p1871) target = $region104
      $region103: #{tpu_custom_call.1} parent=5 // pred_region
        %s1874 = ssub.s32 %s30, 2
        // Predicated region
        $region105: #{tpu_custom_call.1} parent=103 // pred_check
          %p1875 = pneg %p440
        $region106: #{tpu_custom_call.1} parent=103 // pred_check_branch
          %1877 = sbr.rel (%p1875) target = $region108
        $region107: #{tpu_custom_call.1} parent=103 // pred_region
          %s1878 = sand.u32 %s425, 1
          %s1879 = scalar_lea.sflag [#allocation4], %s1878
          %s1880 = sand.u32 %s425, 1
          %s1881 = smul.addr %s1880, 8
          %s1882 = scalar_lea.vmem [#allocation7], %s1881
          %1883 = dma.done %s1879, 128
        $region108: #{tpu_custom_call.1} parent=103 // pred_fallthru
          _
      $region104: #{tpu_custom_call.1} parent=5 // pred_fallthru
        _
    $region6: #{tpu_custom_call.1} parent=1 // loop_footer
      %s34 = sadd.s32 1, %s30
    $region7: #{tpu_custom_call.1} parent=1 // loop_footer_branch
      %29 = sbr.rel target = $region3
    $region8: #{tpu_custom_call.1} parent=1 // loop_exit
      _
    %1884 = vsyncpa [#allocation3], 1
    %s1885 = scalar_lea.sflag [#allocation3], 1
    %1886 = vsyncpa %s1885, 1
    %1887 = vsyncpa [#allocation6], 1
    %1888 = vsyncpa [#allocation4], 1
    %s1889 = scalar_lea.sflag [#allocation4], 1
    %1890 = vsyncpa %s1889, 1

</llo_original>
